<compile_context>
chip_gen: v6e
topology: v6e:2x2x1
jax: 0.10.0
libtpu: 0.0.40
codegen_flags: <defaults>
</compile_context>

<pallas_src>
import functools

import jax
import jax.numpy as jnp
from jax.experimental import pallas as pl
from jax.experimental.pallas import tpu as pltpu


def _round_up(x, m):
    return ((x + m - 1) // m) * m


# ----------------------------------------------------------------------------
# Recurrent GRU kernel: grid = (batch blocks, time chunks).
# Per chunk: one big input-gate matmul (off the serial chain), then TT
# statically-unrolled steps with a single fused bf16 h@W_hh matmul each.
# ----------------------------------------------------------------------------
def gru_recurrence_kernel(x_ref, h0_ref, wih_ref, whh_ref, bi_ref, bhn_ref,
                          hs_ref, hfin_ref, h_scr):
    c = pl.program_id(1)

    # Initialize carried hidden state at the start of each batch block's sweep.
    @pl.when(c == 0)
    def _():
        h_scr[...] = h0_ref[...]

    TT, Bpc, E = x_ref.shape
    H = whh_ref.shape[0]

    wih = wih_ref[...]                                   # (E, 3H) bf16, resident
    whh = whh_ref[...]                                   # (H, 3H) bf16, resident
    bhn = jnp.broadcast_to(bhn_ref[...], (Bpc, H))       # hoisted (no per-iter bcast)

    # Per-chunk input-gate matmul: one (TT*Bpc, E) @ (E, 3H) bf16 MXU matmul,
    # off the serial per-step chain; b_ih (+ folded b_hh_r/b_hh_z) added once.
    x2 = x_ref[...].reshape(TT * Bpc, E)
    gi = jnp.dot(x2, wih, preferred_element_type=jnp.float32) + bi_ref[...]

    h = h_scr[...]                                       # (Bpc, H) f32 carried state
    # TODO(synk): v5e could keep W_hh staged in the MXU across the chunk via
    # pltpu.matmul_push_rhs / matmul_acc_lhs / matmul_pop.
    for i in range(TT):                                  # statically unrolled
        gh = jnp.dot(h.astype(jnp.bfloat16), whh,
                     preferred_element_type=jnp.float32)          # (Bpc, 3H)
        gi_i = gi[i * Bpc:(i + 1) * Bpc, :]                       # (Bpc, 3H)
        r = jax.nn.sigmoid(gi_i[:, 0:H] + gh[:, 0:H])
        z = jax.nn.sigmoid(gi_i[:, H:2 * H] + gh[:, H:2 * H])
        n = jnp.tanh(gi_i[:, 2 * H:3 * H] + r * (gh[:, 2 * H:3 * H] + bhn))
        h = (1.0 - z) * n + z * h
        # Dense lane-offset store of the full (Bpc, H) step result (no sublane
        # masking: the sublane dim of the block is Bpc, not time).
        hs_ref[:, i * H:(i + 1) * H] = h.astype(hs_ref.dtype)

    h_scr[...] = h

    # Final hidden: resident output block, written once on the last chunk.
    @pl.when(c == pl.num_programs(1) - 1)
    def _():
        hfin_ref[...] = h


# ----------------------------------------------------------------------------
# Output projection kernel: (M, H) @ (H, V) + b, tiled over M and V, parallel.
# ----------------------------------------------------------------------------
def output_proj_kernel(h_ref, w_ref, b_ref, o_ref):
    o_ref[...] = (jnp.dot(h_ref[...], w_ref[...],
                          preferred_element_type=jnp.float32)
                  + b_ref[...]).astype(o_ref.dtype)


def output_projection(hs_flat, w_out, b_out, out_dtype=jnp.bfloat16):
    M, H = hs_flat.shape
    V = w_out.shape[1]
    tm = min(512, _round_up(M, 8))        # large M tiles -> fewer W re-streams
    tv = min(512, _round_up(V, 128))      # lane-dense V tiles (multiple of 128)
    Mp = _round_up(M, tm)
    Vp = _round_up(V, tv)
    if Mp != M:
        hs_flat = jnp.pad(hs_flat, ((0, Mp - M), (0, 0)))
    if Vp != V:
        w_out = jnp.pad(w_out, ((0, 0), (0, Vp - V)))
        b_out = jnp.pad(b_out, ((0, 0), (0, Vp - V)))
    grid = (Mp // tm, Vp // tv)
    out = pl.pallas_call(
        output_proj_kernel,
        out_shape=jax.ShapeDtypeStruct((Mp, Vp), out_dtype),
        grid_spec=pltpu.PrefetchScalarGridSpec(
            num_scalar_prefetch=0,
            grid=grid,
            in_specs=[
                pl.BlockSpec((tm, H), lambda i, j: (i, 0)),
                pl.BlockSpec((H, tv), lambda i, j: (0, j)),
                pl.BlockSpec((1, tv), lambda i, j: (0, j)),
            ],
            out_specs=pl.BlockSpec((tm, tv), lambda i, j: (i, j)),
        ),
        compiler_params=pltpu.CompilerParams(
            dimension_semantics=("parallel", "parallel")),
    )(hs_flat, w_out, b_out)
    return out[:M, :V]


# ----------------------------------------------------------------------------
# Time-chunk selection from a VMEM byte budget.
# ----------------------------------------------------------------------------
def _choose_time_chunk(T, Bpc, E, H, budget_bytes=12 << 20):
    # Per-unit-of-TT bytes: x chunk bf16 (x2 buffers) + hs-out bf16 (x2) +
    # in-kernel (TT*Bpc, 3H) f32 gi intermediate + loaded x value.
    per_tt = Bpc * (2 * 2 * E + 2 * 2 * H + 4 * 3 * H + 2 * E)
    cap = max(1, budget_bytes // max(per_tt, 1))
    best = 1
    for d in range(1, T + 1):
        if T % d != 0 or d > cap:
            continue
        # hs out block lane dim (TT*H) must be a multiple of 128 or the full T*H.
        if (d * H) % 128 == 0 or d == T:
            best = max(best, d)
    if best == 1 and (H % 128 != 0) and T > 1:
        # No lane-aligned divisor within budget: fall back to a single chunk
        # (full-dim block is always legal).
        # TODO(synk): for very long VMEM-busting T with odd H, pad T instead.
        best = T
    return best


# ----------------------------------------------------------------------------
# Wrapper: Decoder.forward
# ----------------------------------------------------------------------------
def decoder_forward(tokens, params, hidden=None, *, batch_splits=1,
                    logits_dtype=jnp.bfloat16):
    """tokens: (B, T) int32 -> (logits (B, T, V), hidden (1, B, H) f32).

    batch_splits=2 adds a 'parallel' batch grid axis for v7x's two TensorCores
    (leave at 1 on single-TC v5e/v6e where it would only lengthen the serial
    recurrence)."""
    embed = params["embed"].astype(jnp.bfloat16)     # (V, E)
    w_ih = params["w_ih"].astype(jnp.bfloat16)       # (E, 3H)
    w_hh = params["w_hh"].astype(jnp.bfloat16)       # (H, 3H) bf16 MXU path
    b_ih = params["b_ih"].astype(jnp.float32)        # (1, 3H)
    b_hh = params["b_hh"].astype(jnp.float32)        # (1, 3H)
    w_out = params["w_out"].astype(jnp.bfloat16)     # (H, V)
    b_out = params["b_out"].astype(jnp.float32)      # (1, V)

    B, T = tokens.shape
    V, E = embed.shape
    H = params["w_hh"].shape[0]

    # Batch padding: multiple of 16 (bf16 sublane packing) per batch block.
    n_b = max(1, int(batch_splits))
    Bp = _round_up(max(B, 16 * n_b), 16 * n_b)
    Bpc = Bp // n_b

    TT = _choose_time_chunk(T, Bpc, E, H)
    n_chunks = T // TT

    # Embedding gather (XLA), built time-major directly.
    # TODO(synk): the arbitrary-index embedding gather stays in XLA; a Pallas
    # DMA-gather kernel is not worthwhile here.
    x_tm = jnp.take(embed, tokens.T, axis=0)                  # (T, B, E) bf16
    x_tm = jnp.pad(x_tm, ((0, 0), (0, Bp - B), (0, 0)))       # (T, Bp, E)

    # Fold b_hh_r / b_hh_z into the input-gate bias; b_hh_n stays separate.
    bi = b_ih + jnp.concatenate(
        [b_hh[:, 0:2 * H], jnp.zeros((1, H), jnp.float32)], axis=1)   # (1, 3H)
    bhn = b_hh[:, 2 * H:3 * H]                                        # (1, H)

    if hidden is None:
        h0 = jnp.zeros((Bp, H), jnp.float32)
    else:
        h0 = jnp.zeros((Bp, H), jnp.float32).at[:B].set(
            hidden.reshape(B, H).astype(jnp.float32))

    full = lambda shape: pl.BlockSpec(shape, lambda b, c: (0, 0))

    grid_spec = pltpu.PrefetchScalarGridSpec(
        num_scalar_prefetch=0,
        grid=(n_b, n_chunks),
        in_specs=[
            pl.BlockSpec((TT, Bpc, E), lambda b, c: (c, b, 0)),   # x chunk
            pl.BlockSpec((Bpc, H), lambda b, c: (b, 0)),          # h0
            full((E, 3 * H)),                                     # W_ih (resident)
            full((H, 3 * H)),                                     # W_hh (resident)
            full((1, 3 * H)),                                     # b_i (folded)
            full((1, H)),                                         # b_hh_n
        ],
        out_specs=[
            pl.BlockSpec((Bpc, TT * H), lambda b, c: (b, c)),     # hidden states
            pl.BlockSpec((Bpc, H), lambda b, c: (b, 0)),          # final hidden
        ],
        scratch_shapes=[pltpu.VMEM((Bpc, H), jnp.float32)],       # carried h
    )

    # VMEM limit: resident weights/bias/h0/hfin (double-buffered) + scratch +
    # streamed chunk blocks + in-kernel gi intermediate, with headroom.
    resident = 2 * (E * 3 * H * 2 + H * 3 * H * 2 + 3 * H * 4 + H * 4
                    + Bpc * H * 4 + Bpc * H * 4) + Bpc * H * 4
    streamed = TT * Bpc * (2 * 2 * E + 2 * 2 * H + 4 * 3 * H + 2 * E)
    vmem_limit = int(min(64 << 20,
                         max(16 << 20, int(2.5 * (resident + streamed)))))

    hs2d, h_fin = pl.pallas_call(
        gru_recurrence_kernel,
        out_shape=(
            jax.ShapeDtypeStruct((Bp, T * H), jnp.bfloat16),
            jax.ShapeDtypeStruct((Bp, H), jnp.float32),
        ),
        grid_spec=grid_spec,
        compiler_params=pltpu.CompilerParams(
            dimension_semantics=("parallel", "arbitrary"),
            vmem_limit_bytes=vmem_limit),
    )(x_tm, h0, w_ih, w_hh, bi, bhn)

    # (Bp, T*H) row-major == (Bp, T, H); slicing + reshapes are copy-free.
    hs_flat = hs2d[:B].reshape(B * T, H)
    logits = output_projection(hs_flat, w_out, b_out, out_dtype=logits_dtype)
    out = logits.reshape(B, T, V)
    return out, h_fin[:B][None]                     # (1, B, H) like nn.GRU


# ----------------------------------------------------------------------------
# Pure-JAX reference (mirrors torch semantics) for validation.
# ----------------------------------------------------------------------------
def reference_forward(tokens, params, hidden=None):
    x = jnp.take(params["embed"], tokens, axis=0)   # (B, T, E)
    B, T, _ = x.shape
    H = params["w_hh"].shape[0]
    h0 = jnp.zeros((B, H), jnp.float32) if hidden is None else hidden.reshape(B, H)

    def step(h, x_t):
        gi = x_t @ params["w_ih"] + params["b_ih"][0]
        gh = h @ params["w_hh"] + params["b_hh"][0]
        i_r, i_z, i_n = jnp.split(gi, 3, axis=-1)
        h_r, h_z, h_n = jnp.split(gh, 3, axis=-1)
        r = jax.nn.sigmoid(i_r + h_r)
        z = jax.nn.sigmoid(i_z + h_z)
        n = jnp.tanh(i_n + r * h_n)
        h_new = (1.0 - z) * n + z * h
        return h_new, h_new

    h_fin, hs = jax.lax.scan(step, h0, jnp.transpose(x, (1, 0, 2)))
    out = jnp.einsum("tbh,hv->tbv", hs, params["w_out"]) + params["b_out"][0]
    return jnp.transpose(out, (1, 0, 2)), h_fin[None]


def init_params(key, vocab_size, embed_size, hidden_dim):
    """Deterministic init matching the PyTorch module's parameter shapes."""
    ks = jax.random.split(key, 8)
    s = 1.0 / jnp.sqrt(hidden_dim)
    u = lambda k, shape: jax.random.uniform(k, shape, jnp.float32, -s, s)
    return {
        "embed": jax.random.normal(ks[0], (vocab_size, embed_size), jnp.float32),
        "w_ih": u(ks[1], (embed_size, 3 * hidden_dim)),
        "w_hh": u(ks[2], (hidden_dim, 3 * hidden_dim)),
        "b_ih": u(ks[3], (1, 3 * hidden_dim)),
        "b_hh": u(ks[4], (1, 3 * hidden_dim)),
        "w_out": u(ks[5], (hidden_dim, vocab_size)),
        "b_out": u(ks[6], (1, vocab_size)),
    }


if __name__ == "__main__":
    vocab_size, embed_size, hidden_dim = 64, 32, 32
    B, T = 2, 8

    key = jax.random.PRNGKey(0)
    pkey, tkey = jax.random.split(key)
    params = init_params(pkey, vocab_size, embed_size, hidden_dim)
    tokens = jax.random.randint(tkey, (B, T), 0, vocab_size, dtype=jnp.int32)

    fwd = jax.jit(functools.partial(decoder_forward, params=params))
    out, hidden = fwd(tokens)
    jax.block_until_ready((out, hidden))

    # Reference evaluated with the same bf16-rounded weights the kernel uses.
    params_ref = dict(params)
    for k in ("embed", "w_ih", "w_hh", "w_out"):
        params_ref[k] = params[k].astype(jnp.bfloat16).astype(jnp.float32)
    out_ref, hidden_ref = reference_forward(tokens, params_ref)

    out_f32 = out.astype(jnp.float32)
    assert out.shape == (B, T, vocab_size) and hidden.shape == (1, B, hidden_dim)
    assert jnp.allclose(out_f32, out_ref, atol=2e-2, rtol=2e-2), \
        float(jnp.max(jnp.abs(out_f32 - out_ref)))
    assert jnp.allclose(hidden, hidden_ref, atol=2e-2, rtol=2e-2), \
        float(jnp.max(jnp.abs(hidden - hidden_ref)))

    print("KERNEL_OK")
</pallas_src>

<mosaic_0001>
module attributes {stable_mosaic.version = 11 : i64} {
  func.func @output_proj_kernel(%arg0: i32, %arg1: i32, %arg2: memref<16x32xbf16, #tpu.memory_space<vmem>>, %arg3: memref<32x128xbf16, #tpu.memory_space<vmem>>, %arg4: memref<1x128xf32, #tpu.memory_space<vmem>>, %arg5: memref<16x128xbf16, #tpu.memory_space<vmem>>) attributes {dimension_semantics = [#tpu.dimension_semantics<parallel>, #tpu.dimension_semantics<parallel>], iteration_bounds = array<i64: 1, 1>, scalar_prefetch = 0 : i64, scratch_operands = 0 : i64, tpu.core_type = #tpu.core_type<tc>, window_params = [{transform_indices = @transform_0, window_bounds = array<i64: 16, 32>}, {transform_indices = @transform_1, window_bounds = array<i64: 32, 128>}, {transform_indices = @transform_2, window_bounds = array<i64: 1, 128>}, {transform_indices = @transform_3, window_bounds = array<i64: 16, 128>}]} {
    %c0 = arith.constant 0 : index
    %c0_0 = arith.constant 0 : index
    %0 = vector.load %arg2[%c0, %c0_0] : memref<16x32xbf16, #tpu.memory_space<vmem>>, vector<16x32xbf16>
    %c0_1 = arith.constant 0 : index
    %c0_2 = arith.constant 0 : index
    %1 = vector.load %arg3[%c0_1, %c0_2] : memref<32x128xbf16, #tpu.memory_space<vmem>>, vector<32x128xbf16>
    %cst = arith.constant dense<0.000000e+00> : vector<16x128xf32>
    %2 = tpu.matmul %0, %1, %cst {dimension_numbers = #tpu.dot_dimension_numbers<[1], [0], [0], [1], [0, 0, 1, 1], [], []>} : vector<16x32xbf16>, vector<32x128xbf16>, vector<16x128xf32> -> vector<16x128xf32>
    %c0_3 = arith.constant 0 : index
    %c0_4 = arith.constant 0 : index
    %3 = vector.load %arg4[%c0_3, %c0_4] : memref<1x128xf32, #tpu.memory_space<vmem>>, vector<1x128xf32>
    %4 = vector.broadcast %3 : vector<1x128xf32> to vector<16x128xf32>
    %5 = arith.addf %2, %4 : vector<16x128xf32>
    %6 = arith.truncf %5 : vector<16x128xf32> to vector<16x128xbf16>
    %c0_5 = arith.constant 0 : index
    %c0_6 = arith.constant 0 : index
    %7 = vector.load %arg5[%c0_5, %c0_6] : memref<16x128xbf16, #tpu.memory_space<vmem>>, vector<16x128xbf16>
    tpu.vector_store %arg5[%c0_5, %c0_6], %6 {strides = array<i32>} : memref<16x128xbf16, #tpu.memory_space<vmem>>, vector<16x128xbf16>,
    return
  }
  func.func @transform_0(%arg0: i32, %arg1: i32) -> (i32, i32) {
    %c0_i32 = arith.constant 0 : i32
    %c0_i32_0 = arith.constant 0 : i32
    return %arg0, %c0_i32 : i32, i32
  }
  func.func @transform_1(%arg0: i32, %arg1: i32) -> (i32, i32) {
    %c0_i32 = arith.constant 0 : i32
    %c0_i32_0 = arith.constant 0 : i32
    return %c0_i32, %arg1 : i32, i32
  }
  func.func @transform_2(%arg0: i32, %arg1: i32) -> (i32, i32) {
    %c0_i32 = arith.constant 0 : i32
    %c0_i32_0 = arith.constant 0 : i32
    return %c0_i32, %arg1 : i32, i32
  }
  func.func @transform_3(%arg0: i32, %arg1: i32) -> (i32, i32) {
    %c0_i32 = arith.constant 0 : i32
    return %arg0, %arg1 : i32, i32
  }
}

module attributes {stable_mosaic.version = 11 : i64} {
  func.func @gru_recurrence_kernel(%arg0: i32, %arg1: i32, %arg2: memref<8x16x32xbf16, #tpu.memory_space<vmem>>, %arg3: memref<16x32xf32, #tpu.memory_space<vmem>>, %arg4: memref<32x96xbf16, #tpu.memory_space<vmem>>, %arg5: memref<32x96xbf16, #tpu.memory_space<vmem>>, %arg6: memref<1x96xf32, #tpu.memory_space<vmem>>, %arg7: memref<1x32xf32, #tpu.memory_space<vmem>>, %arg8: memref<16x256xbf16, #tpu.memory_space<vmem>>, %arg9: memref<16x32xf32, #tpu.memory_space<vmem>>, %arg10: memref<16x32xf32, #tpu.memory_space<vmem>>) attributes {dimension_semantics = [#tpu.dimension_semantics<parallel>, #tpu.dimension_semantics<arbitrary>], iteration_bounds = array<i64: 1, 1>, scalar_prefetch = 0 : i64, scratch_operands = 1 : i64, tpu.core_type = #tpu.core_type<tc>, window_params = [{transform_indices = @transform_0, window_bounds = array<i64: 8, 16, 32>}, {transform_indices = @transform_1, window_bounds = array<i64: 16, 32>}, {pipeline_mode = #tpu.pipeline_mode<synchronous>, transform_indices = @transform_2, window_bounds = array<i64: 32, 96>}, {pipeline_mode = #tpu.pipeline_mode<synchronous>, transform_indices = @transform_3, window_bounds = array<i64: 32, 96>}, {pipeline_mode = #tpu.pipeline_mode<synchronous>, transform_indices = @transform_4, window_bounds = array<i64: 1, 96>}, {pipeline_mode = #tpu.pipeline_mode<synchronous>, transform_indices = @transform_5, window_bounds = array<i64: 1, 32>}, {transform_indices = @transform_6, window_bounds = array<i64: 16, 256>}, {transform_indices = @transform_7, window_bounds = array<i64: 16, 32>}]} {
    %c0_i32 = arith.constant 0 : i32
    %0 = arith.cmpi eq, %arg1, %c0_i32 : i32
    %1 = arith.extui %0 : i1 to i32
    %c0_i32_0 = arith.constant 0 : i32
    %2 = arith.cmpi ne, %1, %c0_i32_0 : i32
    scf.if %2 {
      %c0_58 = arith.constant 0 : index
      %c0_59 = arith.constant 0 : index
      %275 = vector.load %arg3[%c0_58, %c0_59] : memref<16x32xf32, #tpu.memory_space<vmem>>, vector<16x32xf32>
      %c0_60 = arith.constant 0 : index
      %c0_61 = arith.constant 0 : index
      %276 = vector.load %arg10[%c0_60, %c0_61] : memref<16x32xf32, #tpu.memory_space<vmem>>, vector<16x32xf32>
      tpu.vector_store %arg10[%c0_60, %c0_61], %275 {strides = array<i32>} : memref<16x32xf32, #tpu.memory_space<vmem>>, vector<16x32xf32>,
    } else {
    }
    %c0 = arith.constant 0 : index
    %c0_1 = arith.constant 0 : index
    %3 = vector.load %arg4[%c0, %c0_1] : memref<32x96xbf16, #tpu.memory_space<vmem>>, vector<32x96xbf16>
    %c0_2 = arith.constant 0 : index
    %c0_3 = arith.constant 0 : index
    %4 = vector.load %arg5[%c0_2, %c0_3] : memref<32x96xbf16, #tpu.memory_space<vmem>>, vector<32x96xbf16>
    %c0_4 = arith.constant 0 : index
    %c0_5 = arith.constant 0 : index
    %5 = vector.load %arg7[%c0_4, %c0_5] : memref<1x32xf32, #tpu.memory_space<vmem>>, vector<1x32xf32>
    %6 = vector.shape_cast %5 : vector<1x32xf32> to vector<1x32xf32>
    %7 = vector.broadcast %6 : vector<1x32xf32> to vector<16x32xf32>
    %c0_6 = arith.constant 0 : index
    %c0_7 = arith.constant 0 : index
    %c0_8 = arith.constant 0 : index
    %8 = vector.load %arg2[%c0_6, %c0_7, %c0_8] : memref<8x16x32xbf16, #tpu.memory_space<vmem>>, vector<8x16x32xbf16>
    %9 = vector.shape_cast %8 : vector<8x16x32xbf16> to vector<128x32xbf16>
    %cst = arith.constant dense<0.000000e+00> : vector<128x96xf32>
    %10 = tpu.matmul %9, %3, %cst {dimension_numbers = #tpu.dot_dimension_numbers<[1], [0], [0], [1], [0, 0, 1, 1], [], []>} : vector<128x32xbf16>, vector<32x96xbf16>, vector<128x96xf32> -> vector<128x96xf32>
    %c0_9 = arith.constant 0 : index
    %c0_10 = arith.constant 0 : index
    %11 = vector.load %arg6[%c0_9, %c0_10] : memref<1x96xf32, #tpu.memory_space<vmem>>, vector<1x96xf32>
    %12 = vector.broadcast %11 : vector<1x96xf32> to vector<128x96xf32>
    %13 = arith.addf %10, %12 : vector<128x96xf32>
    %c0_11 = arith.constant 0 : index
    %c0_12 = arith.constant 0 : index
    %14 = vector.load %arg10[%c0_11, %c0_12] : memref<16x32xf32, #tpu.memory_space<vmem>>, vector<16x32xf32>
    %15 = arith.truncf %14 : vector<16x32xf32> to vector<16x32xbf16>
    %cst_13 = arith.constant dense<0.000000e+00> : vector<16x96xf32>
    %16 = tpu.matmul %15, %4, %cst_13 {dimension_numbers = #tpu.dot_dimension_numbers<[1], [0], [0], [1], [0, 0, 1, 1], [], []>} : vector<16x32xbf16>, vector<32x96xbf16>, vector<16x96xf32> -> vector<16x96xf32>
    %17 = vector.extract_strided_slice %13 {offsets = [0, 0], sizes = [16, 96], strides = [1, 1]} : vector<128x96xf32> to vector<16x96xf32>
    %18 = vector.extract_strided_slice %17 {offsets = [0, 0], sizes = [16, 32], strides = [1, 1]} : vector<16x96xf32> to vector<16x32xf32>
    %19 = vector.extract_strided_slice %16 {offsets = [0, 0], sizes = [16, 32], strides = [1, 1]} : vector<16x96xf32> to vector<16x32xf32>
    %20 = arith.addf %18, %19 : vector<16x32xf32>
    %21 = arith.negf %20 : vector<16x32xf32>
    %22 = math.exp %21 : vector<16x32xf32>
    %cst_14 = arith.constant 1.000000e+00 : f32
    %23 = vector.broadcast %cst_14 : f32 to vector<16x32xf32>
    %24 = arith.addf %23, %22 : vector<16x32xf32>
    %25 = arith.divf %23, %24 : vector<16x32xf32>
    %26 = vector.extract_strided_slice %17 {offsets = [0, 32], sizes = [16, 32], strides = [1, 1]} : vector<16x96xf32> to vector<16x32xf32>
    %27 = vector.extract_strided_slice %16 {offsets = [0, 32], sizes = [16, 32], strides = [1, 1]} : vector<16x96xf32> to vector<16x32xf32>
    %28 = arith.addf %26, %27 : vector<16x32xf32>
    %29 = arith.negf %28 : vector<16x32xf32>
    %30 = math.exp %29 : vector<16x32xf32>
    %cst_15 = arith.constant 1.000000e+00 : f32
    %31 = vector.broadcast %cst_15 : f32 to vector<16x32xf32>
    %32 = arith.addf %31, %30 : vector<16x32xf32>
    %33 = arith.divf %31, %32 : vector<16x32xf32>
    %34 = vector.extract_strided_slice %17 {offsets = [0, 64], sizes = [16, 32], strides = [1, 1]} : vector<16x96xf32> to vector<16x32xf32>
    %35 = vector.extract_strided_slice %16 {offsets = [0, 64], sizes = [16, 32], strides = [1, 1]} : vector<16x96xf32> to vector<16x32xf32>
    %36 = arith.addf %35, %7 : vector<16x32xf32>
    %37 = arith.mulf %25, %36 : vector<16x32xf32>
    %38 = arith.addf %34, %37 : vector<16x32xf32>
    %39 = math.tanh %38 : vector<16x32xf32>
    %cst_16 = arith.constant 1.000000e+00 : f32
    %40 = vector.broadcast %cst_16 : f32 to vector<16x32xf32>
    %41 = arith.subf %40, %33 : vector<16x32xf32>
    %42 = arith.mulf %41, %39 : vector<16x32xf32>
    %43 = arith.mulf %33, %14 : vector<16x32xf32>
    %44 = arith.addf %42, %43 : vector<16x32xf32>
    %45 = arith.truncf %44 : vector<16x32xf32> to vector<16x32xbf16>
    %c0_17 = arith.constant 0 : index
    %c0_18 = arith.constant 0 : index
    %46 = vector.load %arg8[%c0_17, %c0_18] : memref<16x256xbf16, #tpu.memory_space<vmem>>, vector<16x32xbf16>
    tpu.vector_store %arg8[%c0_17, %c0_18], %45 {strides = array<i32>} : memref<16x256xbf16, #tpu.memory_space<vmem>>, vector<16x32xbf16>,
    %47 = arith.truncf %44 : vector<16x32xf32> to vector<16x32xbf16>
    %cst_19 = arith.constant dense<0.000000e+00> : vector<16x96xf32>
    %48 = tpu.matmul %47, %4, %cst_19 {dimension_numbers = #tpu.dot_dimension_numbers<[1], [0], [0], [1], [0, 0, 1, 1], [], []>} : vector<16x32xbf16>, vector<32x96xbf16>, vector<16x96xf32> -> vector<16x96xf32>
    %49 = vector.extract_strided_slice %13 {offsets = [16, 0], sizes = [16, 96], strides = [1, 1]} : vector<128x96xf32> to vector<16x96xf32>
    %50 = vector.extract_strided_slice %49 {offsets = [0, 0], sizes = [16, 32], strides = [1, 1]} : vector<16x96xf32> to vector<16x32xf32>
    %51 = vector.extract_strided_slice %48 {offsets = [0, 0], sizes = [16, 32], strides = [1, 1]} : vector<16x96xf32> to vector<16x32xf32>
    %52 = arith.addf %50, %51 : vector<16x32xf32>
    %53 = arith.negf %52 : vector<16x32xf32>
    %54 = math.exp %53 : vector<16x32xf32>
    %cst_20 = arith.constant 1.000000e+00 : f32
    %55 = vector.broadcast %cst_20 : f32 to vector<16x32xf32>
    %56 = arith.addf %55, %54 : vector<16x32xf32>
    %57 = arith.divf %55, %56 : vector<16x32xf32>
    %58 = vector.extract_strided_slice %49 {offsets = [0, 32], sizes = [16, 32], strides = [1, 1]} : vector<16x96xf32> to vector<16x32xf32>
    %59 = vector.extract_strided_slice %48 {offsets = [0, 32], sizes = [16, 32], strides = [1, 1]} : vector<16x96xf32> to vector<16x32xf32>
    %60 = arith.addf %58, %59 : vector<16x32xf32>
    %61 = arith.negf %60 : vector<16x32xf32>
    %62 = math.exp %61 : vector<16x32xf32>
    %cst_21 = arith.constant 1.000000e+00 : f32
    %63 = vector.broadcast %cst_21 : f32 to vector<16x32xf32>
    %64 = arith.addf %63, %62 : vector<16x32xf32>
    %65 = arith.divf %63, %64 : vector<16x32xf32>
    %66 = vector.extract_strided_slice %49 {offsets = [0, 64], sizes = [16, 32], strides = [1, 1]} : vector<16x96xf32> to vector<16x32xf32>
    %67 = vector.extract_strided_slice %48 {offsets = [0, 64], sizes = [16, 32], strides = [1, 1]} : vector<16x96xf32> to vector<16x32xf32>
    %68 = arith.addf %67, %7 : vector<16x32xf32>
    %69 = arith.mulf %57, %68 : vector<16x32xf32>
    %70 = arith.addf %66, %69 : vector<16x32xf32>
    %71 = math.tanh %70 : vector<16x32xf32>
    %cst_22 = arith.constant 1.000000e+00 : f32
    %72 = vector.broadcast %cst_22 : f32 to vector<16x32xf32>
    %73 = arith.subf %72, %65 : vector<16x32xf32>
    %74 = arith.mulf %73, %71 : vector<16x32xf32>
    %75 = arith.mulf %65, %44 : vector<16x32xf32>
    %76 = arith.addf %74, %75 : vector<16x32xf32>
    %77 = arith.truncf %76 : vector<16x32xf32> to vector<16x32xbf16>
    %c0_23 = arith.constant 0 : index
    %c32 = arith.constant 32 : index
    %78 = vector.load %arg8[%c0_23, %c32] : memref<16x256xbf16, #tpu.memory_space<vmem>>, vector<16x32xbf16>
    tpu.vector_store %arg8[%c0_23, %c32], %77 {strides = array<i32>} : memref<16x256xbf16, #tpu.memory_space<vmem>>, vector<16x32xbf16>,
    %79 = arith.truncf %76 : vector<16x32xf32> to vector<16x32xbf16>
    %cst_24 = arith.constant dense<0.000000e+00> : vector<16x96xf32>
    %80 = tpu.matmul %79, %4, %cst_24 {dimension_numbers = #tpu.dot_dimension_numbers<[1], [0], [0], [1], [0, 0, 1, 1], [], []>} : vector<16x32xbf16>, vector<32x96xbf16>, vector<16x96xf32> -> vector<16x96xf32>
    %81 = vector.extract_strided_slice %13 {offsets = [32, 0], sizes = [16, 96], strides = [1, 1]} : vector<128x96xf32> to vector<16x96xf32>
    %82 = vector.extract_strided_slice %81 {offsets = [0, 0], sizes = [16, 32], strides = [1, 1]} : vector<16x96xf32> to vector<16x32xf32>
    %83 = vector.extract_strided_slice %80 {offsets = [0, 0], sizes = [16, 32], strides = [1, 1]} : vector<16x96xf32> to vector<16x32xf32>
    %84 = arith.addf %82, %83 : vector<16x32xf32>
    %85 = arith.negf %84 : vector<16x32xf32>
    %86 = math.exp %85 : vector<16x32xf32>
    %cst_25 = arith.constant 1.000000e+00 : f32
    %87 = vector.broadcast %cst_25 : f32 to vector<16x32xf32>
    %88 = arith.addf %87, %86 : vector<16x32xf32>
    %89 = arith.divf %87, %88 : vector<16x32xf32>
    %90 = vector.extract_strided_slice %81 {offsets = [0, 32], sizes = [16, 32], strides = [1, 1]} : vector<16x96xf32> to vector<16x32xf32>
    %91 = vector.extract_strided_slice %80 {offsets = [0, 32], sizes = [16, 32], strides = [1, 1]} : vector<16x96xf32> to vector<16x32xf32>
    %92 = arith.addf %90, %91 : vector<16x32xf32>
    %93 = arith.negf %92 : vector<16x32xf32>
    %94 = math.exp %93 : vector<16x32xf32>
    %cst_26 = arith.constant 1.000000e+00 : f32
    %95 = vector.broadcast %cst_26 : f32 to vector<16x32xf32>
    %96 = arith.addf %95, %94 : vector<16x32xf32>
    %97 = arith.divf %95, %96 : vector<16x32xf32>
    %98 = vector.extract_strided_slice %81 {offsets = [0, 64], sizes = [16, 32], strides = [1, 1]} : vector<16x96xf32> to vector<16x32xf32>
    %99 = vector.extract_strided_slice %80 {offsets = [0, 64], sizes = [16, 32], strides = [1, 1]} : vector<16x96xf32> to vector<16x32xf32>
    %100 = arith.addf %99, %7 : vector<16x32xf32>
    %101 = arith.mulf %89, %100 : vector<16x32xf32>
    %102 = arith.addf %98, %101 : vector<16x32xf32>
    %103 = math.tanh %102 : vector<16x32xf32>
    %cst_27 = arith.constant 1.000000e+00 : f32
    %104 = vector.broadcast %cst_27 : f32 to vector<16x32xf32>
    %105 = arith.subf %104, %97 : vector<16x32xf32>
    %106 = arith.mulf %105, %103 : vector<16x32xf32>
    %107 = arith.mulf %97, %76 : vector<16x32xf32>
    %108 = arith.addf %106, %107 : vector<16x32xf32>
    %109 = arith.truncf %108 : vector<16x32xf32> to vector<16x32xbf16>
    %c0_28 = arith.constant 0 : index
    %c64 = arith.constant 64 : index
    %110 = vector.load %arg8[%c0_28, %c64] : memref<16x256xbf16, #tpu.memory_space<vmem>>, vector<16x32xbf16>
    tpu.vector_store %arg8[%c0_28, %c64], %109 {strides = array<i32>} : memref<16x256xbf16, #tpu.memory_space<vmem>>, vector<16x32xbf16>,
    %111 = arith.truncf %108 : vector<16x32xf32> to vector<16x32xbf16>
    %cst_29 = arith.constant dense<0.000000e+00> : vector<16x96xf32>
    %112 = tpu.matmul %111, %4, %cst_29 {dimension_numbers = #tpu.dot_dimension_numbers<[1], [0], [0], [1], [0, 0, 1, 1], [], []>} : vector<16x32xbf16>, vector<32x96xbf16>, vector<16x96xf32> -> vector<16x96xf32>
    %113 = vector.extract_strided_slice %13 {offsets = [48, 0], sizes = [16, 96], strides = [1, 1]} : vector<128x96xf32> to vector<16x96xf32>
    %114 = vector.extract_strided_slice %113 {offsets = [0, 0], sizes = [16, 32], strides = [1, 1]} : vector<16x96xf32> to vector<16x32xf32>
    %115 = vector.extract_strided_slice %112 {offsets = [0, 0], sizes = [16, 32], strides = [1, 1]} : vector<16x96xf32> to vector<16x32xf32>
    %116 = arith.addf %114, %115 : vector<16x32xf32>
    %117 = arith.negf %116 : vector<16x32xf32>
    %118 = math.exp %117 : vector<16x32xf32>
    %cst_30 = arith.constant 1.000000e+00 : f32
    %119 = vector.broadcast %cst_30 : f32 to vector<16x32xf32>
    %120 = arith.addf %119, %118 : vector<16x32xf32>
    %121 = arith.divf %119, %120 : vector<16x32xf32>
    %122 = vector.extract_strided_slice %113 {offsets = [0, 32], sizes = [16, 32], strides = [1, 1]} : vector<16x96xf32> to vector<16x32xf32>
    %123 = vector.extract_strided_slice %112 {offsets = [0, 32], sizes = [16, 32], strides = [1, 1]} : vector<16x96xf32> to vector<16x32xf32>
    %124 = arith.addf %122, %123 : vector<16x32xf32>
    %125 = arith.negf %124 : vector<16x32xf32>
    %126 = math.exp %125 : vector<16x32xf32>
    %cst_31 = arith.constant 1.000000e+00 : f32
    %127 = vector.broadcast %cst_31 : f32 to vector<16x32xf32>
    %128 = arith.addf %127, %126 : vector<16x32xf32>
    %129 = arith.divf %127, %128 : vector<16x32xf32>
    %130 = vector.extract_strided_slice %113 {offsets = [0, 64], sizes = [16, 32], strides = [1, 1]} : vector<16x96xf32> to vector<16x32xf32>
    %131 = vector.extract_strided_slice %112 {offsets = [0, 64], sizes = [16, 32], strides = [1, 1]} : vector<16x96xf32> to vector<16x32xf32>
    %132 = arith.addf %131, %7 : vector<16x32xf32>
    %133 = arith.mulf %121, %132 : vector<16x32xf32>
    %134 = arith.addf %130, %133 : vector<16x32xf32>
    %135 = math.tanh %134 : vector<16x32xf32>
    %cst_32 = arith.constant 1.000000e+00 : f32
    %136 = vector.broadcast %cst_32 : f32 to vector<16x32xf32>
    %137 = arith.subf %136, %129 : vector<16x32xf32>
    %138 = arith.mulf %137, %135 : vector<16x32xf32>
    %139 = arith.mulf %129, %108 : vector<16x32xf32>
    %140 = arith.addf %138, %139 : vector<16x32xf32>
    %141 = arith.truncf %140 : vector<16x32xf32> to vector<16x32xbf16>
    %c0_33 = arith.constant 0 : index
    %c96 = arith.constant 96 : index
    %142 = vector.load %arg8[%c0_33, %c96] : memref<16x256xbf16, #tpu.memory_space<vmem>>, vector<16x32xbf16>
    tpu.vector_store %arg8[%c0_33, %c96], %141 {strides = array<i32>} : memref<16x256xbf16, #tpu.memory_space<vmem>>, vector<16x32xbf16>,
    %143 = arith.truncf %140 : vector<16x32xf32> to vector<16x32xbf16>
    %cst_34 = arith.constant dense<0.000000e+00> : vector<16x96xf32>
    %144 = tpu.matmul %143, %4, %cst_34 {dimension_numbers = #tpu.dot_dimension_numbers<[1], [0], [0], [1], [0, 0, 1, 1], [], []>} : vector<16x32xbf16>, vector<32x96xbf16>, vector<16x96xf32> -> vector<16x96xf32>
    %145 = vector.extract_strided_slice %13 {offsets = [64, 0], sizes = [16, 96], strides = [1, 1]} : vector<128x96xf32> to vector<16x96xf32>
    %146 = vector.extract_strided_slice %145 {offsets = [0, 0], sizes = [16, 32], strides = [1, 1]} : vector<16x96xf32> to vector<16x32xf32>
    %147 = vector.extract_strided_slice %144 {offsets = [0, 0], sizes = [16, 32], strides = [1, 1]} : vector<16x96xf32> to vector<16x32xf32>
    %148 = arith.addf %146, %147 : vector<16x32xf32>
    %149 = arith.negf %148 : vector<16x32xf32>
    %150 = math.exp %149 : vector<16x32xf32>
    %cst_35 = arith.constant 1.000000e+00 : f32
    %151 = vector.broadcast %cst_35 : f32 to vector<16x32xf32>
    %152 = arith.addf %151, %150 : vector<16x32xf32>
    %153 = arith.divf %151, %152 : vector<16x32xf32>
    %154 = vector.extract_strided_slice %145 {offsets = [0, 32], sizes = [16, 32], strides = [1, 1]} : vector<16x96xf32> to vector<16x32xf32>
    %155 = vector.extract_strided_slice %144 {offsets = [0, 32], sizes = [16, 32], strides = [1, 1]} : vector<16x96xf32> to vector<16x32xf32>
    %156 = arith.addf %154, %155 : vector<16x32xf32>
    %157 = arith.negf %156 : vector<16x32xf32>
    %158 = math.exp %157 : vector<16x32xf32>
    %cst_36 = arith.constant 1.000000e+00 : f32
    %159 = vector.broadcast %cst_36 : f32 to vector<16x32xf32>
    %160 = arith.addf %159, %158 : vector<16x32xf32>
    %161 = arith.divf %159, %160 : vector<16x32xf32>
    %162 = vector.extract_strided_slice %145 {offsets = [0, 64], sizes = [16, 32], strides = [1, 1]} : vector<16x96xf32> to vector<16x32xf32>
    %163 = vector.extract_strided_slice %144 {offsets = [0, 64], sizes = [16, 32], strides = [1, 1]} : vector<16x96xf32> to vector<16x32xf32>
    %164 = arith.addf %163, %7 : vector<16x32xf32>
    %165 = arith.mulf %153, %164 : vector<16x32xf32>
    %166 = arith.addf %162, %165 : vector<16x32xf32>
    %167 = math.tanh %166 : vector<16x32xf32>
    %cst_37 = arith.constant 1.000000e+00 : f32
    %168 = vector.broadcast %cst_37 : f32 to vector<16x32xf32>
    %169 = arith.subf %168, %161 : vector<16x32xf32>
    %170 = arith.mulf %169, %167 : vector<16x32xf32>
    %171 = arith.mulf %161, %140 : vector<16x32xf32>
    %172 = arith.addf %170, %171 : vector<16x32xf32>
    %173 = arith.truncf %172 : vector<16x32xf32> to vector<16x32xbf16>
    %c0_38 = arith.constant 0 : index
    %c128 = arith.constant 128 : index
    %174 = vector.load %arg8[%c0_38, %c128] : memref<16x256xbf16, #tpu.memory_space<vmem>>, vector<16x32xbf16>
    tpu.vector_store %arg8[%c0_38, %c128], %173 {strides = array<i32>} : memref<16x256xbf16, #tpu.memory_space<vmem>>, vector<16x32xbf16>,
    %175 = arith.truncf %172 : vector<16x32xf32> to vector<16x32xbf16>
    %cst_39 = arith.constant dense<0.000000e+00> : vector<16x96xf32>
    %176 = tpu.matmul %175, %4, %cst_39 {dimension_numbers = #tpu.dot_dimension_numbers<[1], [0], [0], [1], [0, 0, 1, 1], [], []>} : vector<16x32xbf16>, vector<32x96xbf16>, vector<16x96xf32> -> vector<16x96xf32>
    %177 = vector.extract_strided_slice %13 {offsets = [80, 0], sizes = [16, 96], strides = [1, 1]} : vector<128x96xf32> to vector<16x96xf32>
    %178 = vector.extract_strided_slice %177 {offsets = [0, 0], sizes = [16, 32], strides = [1, 1]} : vector<16x96xf32> to vector<16x32xf32>
    %179 = vector.extract_strided_slice %176 {offsets = [0, 0], sizes = [16, 32], strides = [1, 1]} : vector<16x96xf32> to vector<16x32xf32>
    %180 = arith.addf %178, %179 : vector<16x32xf32>
    %181 = arith.negf %180 : vector<16x32xf32>
    %182 = math.exp %181 : vector<16x32xf32>
    %cst_40 = arith.constant 1.000000e+00 : f32
    %183 = vector.broadcast %cst_40 : f32 to vector<16x32xf32>
    %184 = arith.addf %183, %182 : vector<16x32xf32>
    %185 = arith.divf %183, %184 : vector<16x32xf32>
    %186 = vector.extract_strided_slice %177 {offsets = [0, 32], sizes = [16, 32], strides = [1, 1]} : vector<16x96xf32> to vector<16x32xf32>
    %187 = vector.extract_strided_slice %176 {offsets = [0, 32], sizes = [16, 32], strides = [1, 1]} : vector<16x96xf32> to vector<16x32xf32>
    %188 = arith.addf %186, %187 : vector<16x32xf32>
    %189 = arith.negf %188 : vector<16x32xf32>
    %190 = math.exp %189 : vector<16x32xf32>
    %cst_41 = arith.constant 1.000000e+00 : f32
    %191 = vector.broadcast %cst_41 : f32 to vector<16x32xf32>
    %192 = arith.addf %191, %190 : vector<16x32xf32>
    %193 = arith.divf %191, %192 : vector<16x32xf32>
    %194 = vector.extract_strided_slice %177 {offsets = [0, 64], sizes = [16, 32], strides = [1, 1]} : vector<16x96xf32> to vector<16x32xf32>
    %195 = vector.extract_strided_slice %176 {offsets = [0, 64], sizes = [16, 32], strides = [1, 1]} : vector<16x96xf32> to vector<16x32xf32>
    %196 = arith.addf %195, %7 : vector<16x32xf32>
    %197 = arith.mulf %185, %196 : vector<16x32xf32>
    %198 = arith.addf %194, %197 : vector<16x32xf32>
    %199 = math.tanh %198 : vector<16x32xf32>
    %cst_42 = arith.constant 1.000000e+00 : f32
    %200 = vector.broadcast %cst_42 : f32 to vector<16x32xf32>
    %201 = arith.subf %200, %193 : vector<16x32xf32>
    %202 = arith.mulf %201, %199 : vector<16x32xf32>
    %203 = arith.mulf %193, %172 : vector<16x32xf32>
    %204 = arith.addf %202, %203 : vector<16x32xf32>
    %205 = arith.truncf %204 : vector<16x32xf32> to vector<16x32xbf16>
    %c0_43 = arith.constant 0 : index
    %c160 = arith.constant 160 : index
    %206 = vector.load %arg8[%c0_43, %c160] : memref<16x256xbf16, #tpu.memory_space<vmem>>, vector<16x32xbf16>
    tpu.vector_store %arg8[%c0_43, %c160], %205 {strides = array<i32>} : memref<16x256xbf16, #tpu.memory_space<vmem>>, vector<16x32xbf16>,
    %207 = arith.truncf %204 : vector<16x32xf32> to vector<16x32xbf16>
    %cst_44 = arith.constant dense<0.000000e+00> : vector<16x96xf32>
    %208 = tpu.matmul %207, %4, %cst_44 {dimension_numbers = #tpu.dot_dimension_numbers<[1], [0], [0], [1], [0, 0, 1, 1], [], []>} : vector<16x32xbf16>, vector<32x96xbf16>, vector<16x96xf32> -> vector<16x96xf32>
    %209 = vector.extract_strided_slice %13 {offsets = [96, 0], sizes = [16, 96], strides = [1, 1]} : vector<128x96xf32> to vector<16x96xf32>
    %210 = vector.extract_strided_slice %209 {offsets = [0, 0], sizes = [16, 32], strides = [1, 1]} : vector<16x96xf32> to vector<16x32xf32>
    %211 = vector.extract_strided_slice %208 {offsets = [0, 0], sizes = [16, 32], strides = [1, 1]} : vector<16x96xf32> to vector<16x32xf32>
    %212 = arith.addf %210, %211 : vector<16x32xf32>
    %213 = arith.negf %212 : vector<16x32xf32>
    %214 = math.exp %213 : vector<16x32xf32>
    %cst_45 = arith.constant 1.000000e+00 : f32
    %215 = vector.broadcast %cst_45 : f32 to vector<16x32xf32>
    %216 = arith.addf %215, %214 : vector<16x32xf32>
    %217 = arith.divf %215, %216 : vector<16x32xf32>
    %218 = vector.extract_strided_slice %209 {offsets = [0, 32], sizes = [16, 32], strides = [1, 1]} : vector<16x96xf32> to vector<16x32xf32>
    %219 = vector.extract_strided_slice %208 {offsets = [0, 32], sizes = [16, 32], strides = [1, 1]} : vector<16x96xf32> to vector<16x32xf32>
    %220 = arith.addf %218, %219 : vector<16x32xf32>
    %221 = arith.negf %220 : vector<16x32xf32>
    %222 = math.exp %221 : vector<16x32xf32>
    %cst_46 = arith.constant 1.000000e+00 : f32
    %223 = vector.broadcast %cst_46 : f32 to vector<16x32xf32>
    %224 = arith.addf %223, %222 : vector<16x32xf32>
    %225 = arith.divf %223, %224 : vector<16x32xf32>
    %226 = vector.extract_strided_slice %209 {offsets = [0, 64], sizes = [16, 32], strides = [1, 1]} : vector<16x96xf32> to vector<16x32xf32>
    %227 = vector.extract_strided_slice %208 {offsets = [0, 64], sizes = [16, 32], strides = [1, 1]} : vector<16x96xf32> to vector<16x32xf32>
    %228 = arith.addf %227, %7 : vector<16x32xf32>
    %229 = arith.mulf %217, %228 : vector<16x32xf32>
    %230 = arith.addf %226, %229 : vector<16x32xf32>
    %231 = math.tanh %230 : vector<16x32xf32>
    %cst_47 = arith.constant 1.000000e+00 : f32
    %232 = vector.broadcast %cst_47 : f32 to vector<16x32xf32>
    %233 = arith.subf %232, %225 : vector<16x32xf32>
    %234 = arith.mulf %233, %231 : vector<16x32xf32>
    %235 = arith.mulf %225, %204 : vector<16x32xf32>
    %236 = arith.addf %234, %235 : vector<16x32xf32>
    %237 = arith.truncf %236 : vector<16x32xf32> to vector<16x32xbf16>
    %c0_48 = arith.constant 0 : index
    %c192 = arith.constant 192 : index
    %238 = vector.load %arg8[%c0_48, %c192] : memref<16x256xbf16, #tpu.memory_space<vmem>>, vector<16x32xbf16>
    tpu.vector_store %arg8[%c0_48, %c192], %237 {strides = array<i32>} : memref<16x256xbf16, #tpu.memory_space<vmem>>, vector<16x32xbf16>,
    %239 = arith.truncf %236 : vector<16x32xf32> to vector<16x32xbf16>
    %cst_49 = arith.constant dense<0.000000e+00> : vector<16x96xf32>
    %240 = tpu.matmul %239, %4, %cst_49 {dimension_numbers = #tpu.dot_dimension_numbers<[1], [0], [0], [1], [0, 0, 1, 1], [], []>} : vector<16x32xbf16>, vector<32x96xbf16>, vector<16x96xf32> -> vector<16x96xf32>
    %241 = vector.extract_strided_slice %13 {offsets = [112, 0], sizes = [16, 96], strides = [1, 1]} : vector<128x96xf32> to vector<16x96xf32>
    %242 = vector.extract_strided_slice %241 {offsets = [0, 0], sizes = [16, 32], strides = [1, 1]} : vector<16x96xf32> to vector<16x32xf32>
    %243 = vector.extract_strided_slice %240 {offsets = [0, 0], sizes = [16, 32], strides = [1, 1]} : vector<16x96xf32> to vector<16x32xf32>
    %244 = arith.addf %242, %243 : vector<16x32xf32>
    %245 = arith.negf %244 : vector<16x32xf32>
    %246 = math.exp %245 : vector<16x32xf32>
    %cst_50 = arith.constant 1.000000e+00 : f32
    %247 = vector.broadcast %cst_50 : f32 to vector<16x32xf32>
    %248 = arith.addf %247, %246 : vector<16x32xf32>
    %249 = arith.divf %247, %248 : vector<16x32xf32>
    %250 = vector.extract_strided_slice %241 {offsets = [0, 32], sizes = [16, 32], strides = [1, 1]} : vector<16x96xf32> to vector<16x32xf32>
    %251 = vector.extract_strided_slice %240 {offsets = [0, 32], sizes = [16, 32], strides = [1, 1]} : vector<16x96xf32> to vector<16x32xf32>
    %252 = arith.addf %250, %251 : vector<16x32xf32>
    %253 = arith.negf %252 : vector<16x32xf32>
    %254 = math.exp %253 : vector<16x32xf32>
    %cst_51 = arith.constant 1.000000e+00 : f32
    %255 = vector.broadcast %cst_51 : f32 to vector<16x32xf32>
    %256 = arith.addf %255, %254 : vector<16x32xf32>
    %257 = arith.divf %255, %256 : vector<16x32xf32>
    %258 = vector.extract_strided_slice %241 {offsets = [0, 64], sizes = [16, 32], strides = [1, 1]} : vector<16x96xf32> to vector<16x32xf32>
    %259 = vector.extract_strided_slice %240 {offsets = [0, 64], sizes = [16, 32], strides = [1, 1]} : vector<16x96xf32> to vector<16x32xf32>
    %260 = arith.addf %259, %7 : vector<16x32xf32>
    %261 = arith.mulf %249, %260 : vector<16x32xf32>
    %262 = arith.addf %258, %261 : vector<16x32xf32>
    %263 = math.tanh %262 : vector<16x32xf32>
    %cst_52 = arith.constant 1.000000e+00 : f32
    %264 = vector.broadcast %cst_52 : f32 to vector<16x32xf32>
    %265 = arith.subf %264, %257 : vector<16x32xf32>
    %266 = arith.mulf %265, %263 : vector<16x32xf32>
    %267 = arith.mulf %257, %236 : vector<16x32xf32>
    %268 = arith.addf %266, %267 : vector<16x32xf32>
    %269 = arith.truncf %268 : vector<16x32xf32> to vector<16x32xbf16>
    %c0_53 = arith.constant 0 : index
    %c224 = arith.constant 224 : index
    %270 = vector.load %arg8[%c0_53, %c224] : memref<16x256xbf16, #tpu.memory_space<vmem>>, vector<16x32xbf16>
    tpu.vector_store %arg8[%c0_53, %c224], %269 {strides = array<i32>} : memref<16x256xbf16, #tpu.memory_space<vmem>>, vector<16x32xbf16>,
    %c0_54 = arith.constant 0 : index
    %c0_55 = arith.constant 0 : index
    %271 = vector.load %arg10[%c0_54, %c0_55] : memref<16x32xf32, #tpu.memory_space<vmem>>, vector<16x32xf32>
    tpu.vector_store %arg10[%c0_54, %c0_55], %268 {strides = array<i32>} : memref<16x32xf32, #tpu.memory_space<vmem>>, vector<16x32xf32>,
    %c0_i32_56 = arith.constant 0 : i32
    %272 = arith.cmpi eq, %arg1, %c0_i32_56 : i32
    %273 = arith.extui %272 : i1 to i32
    %c0_i32_57 = arith.constant 0 : i32
    %274 = arith.cmpi ne, %273, %c0_i32_57 : i32
    scf.if %274 {
      %c0_58 = arith.constant 0 : index
      %c0_59 = arith.constant 0 : index
      %275 = vector.load %arg9[%c0_58, %c0_59] : memref<16x32xf32, #tpu.memory_space<vmem>>, vector<16x32xf32>
      tpu.vector_store %arg9[%c0_58, %c0_59], %268 {strides = array<i32>} : memref<16x32xf32, #tpu.memory_space<vmem>>, vector<16x32xf32>,
    } else {
    }
    return
  }
  func.func @transform_0(%arg0: i32, %arg1: i32) -> (i32, i32, i32) {
    %c0_i32 = arith.constant 0 : i32
    %c0_i32_0 = arith.constant 0 : i32
    return %arg1, %arg0, %c0_i32 : i32, i32, i32
  }
  func.func @transform_1(%arg0: i32, %arg1: i32) -> (i32, i32) {
    %c0_i32 = arith.constant 0 : i32
    %c0_i32_0 = arith.constant 0 : i32
    return %arg0, %c0_i32 : i32, i32
  }
  func.func @transform_2(%arg0: i32, %arg1: i32) -> (i32, i32) {
    %c0_i32 = arith.constant 0 : i32
    %c0_i32_0 = arith.constant 0 : i32
    %c0_i32_1 = arith.constant 0 : i32
    return %c0_i32, %c0_i32_0 : i32, i32
  }
  func.func @transform_3(%arg0: i32, %arg1: i32) -> (i32, i32) {
    %c0_i32 = arith.constant 0 : i32
    %c0_i32_0 = arith.constant 0 : i32
    %c0_i32_1 = arith.constant 0 : i32
    return %c0_i32, %c0_i32_0 : i32, i32
  }
  func.func @transform_4(%arg0: i32, %arg1: i32) -> (i32, i32) {
    %c0_i32 = arith.constant 0 : i32
    %c0_i32_0 = arith.constant 0 : i32
    %c0_i32_1 = arith.constant 0 : i32
    return %c0_i32, %c0_i32_0 : i32, i32
  }
  func.func @transform_5(%arg0: i32, %arg1: i32) -> (i32, i32) {
    %c0_i32 = arith.constant 0 : i32
    %c0_i32_0 = arith.constant 0 : i32
    %c0_i32_1 = arith.constant 0 : i32
    return %c0_i32, %c0_i32_0 : i32, i32
  }
  func.func @transform_6(%arg0: i32, %arg1: i32) -> (i32, i32) {
    %c0_i32 = arith.constant 0 : i32
    return %arg0, %arg1 : i32, i32
  }
  func.func @transform_7(%arg0: i32, %arg1: i32) -> (i32, i32) {
    %c0_i32 = arith.constant 0 : i32
    %c0_i32_0 = arith.constant 0 : i32
    return %arg0, %c0_i32 : i32, i32
  }
}

</mosaic_0001>

<llo_original>
// kernel: decoder_forward.3
$region0: #{decoder_forward.3}
  #allocation0 [shape = 'u32[]', space=smem, size = 0x4, offset = 0x4, fixed_abs, tag = 'smem constant byte address 0x4 - core index']
  #allocation1 [shape = 'u32[144,128]{1,0:T(1,128)}', space=vmem, size = 0x12000, scoped, tag = 'internal scratch']
  %s0 = inlined_call_operand.vmem [shape: bf16[16,32], index: 0, kind: input, shape index: {}]
  %s1 = inlined_call_operand.vmem [shape: bf16[32,128], index: 1, kind: input, shape index: {}]
  %s2 = inlined_call_operand.vmem [shape: f32[1,128], index: 2, kind: input, shape index: {}]
  %s3 = inlined_call_operand.vmem [shape: bf16[16,128], index: 3, kind: output, shape index: {}]
  %s4 = sld [smem:[#allocation0]]
  $region22: #{decoder_forward.3} parent=0
    _
  %s6 = ssub.s32 1, %s4
  %s7 = scalar_select 0, %s6, %s4
  // Predicated region
  $region2: #{decoder_forward.3} parent=0 // pred_check
    _
  $region3: #{decoder_forward.3} parent=0 // pred_check_branch
    %9 = sbr.rel (0) target = $region5
  $region4: #{decoder_forward.3} parent=0 // pred_region
    _
  $region5: #{decoder_forward.3} parent=0 // pred_fallthru
    _
  // Predicated region
  $region6: #{decoder_forward.3} parent=0 // pred_check
    _
  $region7: #{decoder_forward.3} parent=0 // pred_check_branch
    %11 = sbr.rel (0) target = $region9
  $region8: #{decoder_forward.3} parent=0 // pred_region
    _
  $region9: #{decoder_forward.3} parent=0 // pred_fallthru
    _
  // Predicated region
  $region10: #{decoder_forward.3} parent=0 // pred_check
    _
  $region11: #{decoder_forward.3} parent=0 // pred_check_branch
    %13 = sbr.rel (0) target = $region13
  $region12: #{decoder_forward.3} parent=0 // pred_region
    _
  $region13: #{decoder_forward.3} parent=0 // pred_fallthru
    _
  %v15 = vld [vmem:[%s0] sm:$0xf]
  %v16 = vld [vmem:[%s0 + $0x4] sm:$0xf]
  %v17 = vld [vmem:[%s1] sm:$0xf]
  %v18 = vld [vmem:[%s1 + $0x4] sm:$0xf]
  %v19 = vld [vmem:[%s1 + $0x8] sm:$0xf]
  %v20 = vld [vmem:[%s1 + $0xc] sm:$0xf]
  %v21 = vld [vmem:[%s2] sm:$0x1]
  %v23 = vlaneseq
  %v24 = vshrl.u32 %v23, 7
  %v25 = vsub.s32 0, %v24
  %v26 = vrot.slane %v21, %v25
  %v30 = vunpack.c.l.b16 %v15
  %v31 = vunpack.c.l.b16 %v16
  %v32 = vpack.c.b16 %v31, %v30
  %v37 = vunpack.c.l.b16 %v17
  %v38 = vunpack.c.l.b16 %v18
  %v39 = vunpack.c.l.b16 %v19
  %v40 = vunpack.c.l.b16 %v20
  %v41 = vpack.c.b16 %v38, %v37
  %v42 = vpack.c.b16 %v40, %v39
  %vm45 = vcmask 261120
  %v47 = vsel %vm45, %v32, 0
  %49 = vmatprep.subr.bf16.mxu0 0
  %50 = vmatpush1.bf16.msra.mxu0 0
  %51 = vmatprep.subr.bf16.mxu0 0
  %52 = vmatpush1.bf16.msra.mxu0 0
  %53 = vmatprep.subr.bf16.mxu0 0
  %54 = vmatpush1.bf16.msra.mxu0 0
  %55 = vmatprep.subr.bf16.mxu0 0
  %56 = vmatpush1.bf16.msra.mxu0 0
  %57 = vmatprep.subr.bf16.mxu0 0
  %58 = vmatpush1.bf16.msra.mxu0 0
  %59 = vmatprep.subr.bf16.mxu0 0
  %60 = vmatpush1.bf16.msra.mxu0 0
  %61 = vmatprep.subr.bf16.mxu0 0
  %62 = vmatpush1.bf16.msra.mxu0 %v42
  %63 = vmatprep.subr.bf16.mxu0 0
  %64 = vmatpush1.bf16.msra.mxu0 %v41
  %65 = vmatprep.subr.bf16.mxu0 0
  %66 = vmatpush2.bf16.msra.mxu0 0
  %67 = vmatprep.subr.bf16.mxu0 0
  %68 = vmatpush2.bf16.msra.mxu0 0
  %69 = vmatprep.subr.bf16.mxu0 0
  %70 = vmatpush2.bf16.msra.mxu0 0
  %71 = vmatprep.subr.bf16.mxu0 0
  %72 = vmatpush2.bf16.msra.mxu0 0
  %73 = vmatprep.subr.bf16.mxu0 0
  %74 = vmatpush2.bf16.msra.mxu0 0
  %75 = vmatprep.subr.bf16.mxu0 0
  %76 = vmatpush2.bf16.msra.mxu0 0
  %77 = vmatprep.subr.bf16.mxu0 0
  %78 = vmatpush2.bf16.msra.mxu0 0
  %79 = vmatprep.subr.bf16.mxu0 0
  %80 = vmatpush2.bf16.msra.mxu0 0
  %81 = vmatprep.mubr.bf16.mxu0 0
  %82 = vmatmul.mubr.bf16.gmra.mxu0 %v47
  %v83 = vpop.f32.mrf.mxu0
  %v84 = vadd.f32 %v26, %v83
  %v85 = vpop.f32.mrf.mxu0
  %v86 = vpop.f32.mrf.mxu0
  %v87 = vadd.f32 %v26, %v86
  %v88 = vpop.f32.mrf.mxu0
  %89 = vdwg.mxu0
  %v90 = vpack.c.bf16 %v87, %v84
  %v92 = vunpack.c.l.b16 %v90
  %v93 = vunpack.c.h.b16 %v90
  %v94 = vpack.c.b16 %v92, %v92
  %v95 = vpack.c.b16 %v93, %v93
  %98 = vst [vmem:[%s3] sm:$0xf] %v94
  %99 = vst [vmem:[%s3 + $0x4] sm:$0xf] %v95
  // Predicated region
  $region14: #{decoder_forward.3} parent=0 // pred_check
    _
  $region15: #{decoder_forward.3} parent=0 // pred_check_branch
    %101 = sbr.rel (0) target = $region17
  $region16: #{decoder_forward.3} parent=0 // pred_region
    _
  $region17: #{decoder_forward.3} parent=0 // pred_fallthru
    _
  // Predicated region
  $region18: #{decoder_forward.3} parent=0 // pred_check
    _
  $region19: #{decoder_forward.3} parent=0 // pred_check_branch
    %103 = sbr.rel (0) target = $region21
  $region20: #{decoder_forward.3} parent=0 // pred_region
    _
  $region21: #{decoder_forward.3} parent=0 // pred_fallthru
    _

// kernel: decoder_forward.2
$region0: #{decoder_forward.2}
  #allocation0 [shape = 'u32[]', space=smem, size = 0x4, offset = 0x4, fixed_abs, tag = 'smem constant byte address 0x4 - core index']
  #allocation1 [shape = 'u32[144,128]{1,0:T(1,128)}', space=vmem, size = 0x12000, scoped, tag = 'internal scratch']
  #allocation2 [shape = 'f32[16,32]{1,0:T(8,128)}', space=vmem, size = 0x2000, scoped, tag = 'scratch operand']
  %s0 = inlined_call_operand.vmem [shape: bf16[8,16,32], index: 0, kind: input, shape index: {}]
  %s1 = inlined_call_operand.vmem [shape: f32[16,32], index: 1, kind: input, shape index: {}]
  %s2 = inlined_call_operand.vmem [shape: bf16[32,96], index: 2, kind: input, shape index: {}]
  %s3 = inlined_call_operand.vmem [shape: bf16[32,96], index: 3, kind: input, shape index: {}]
  %s4 = inlined_call_operand.vmem [shape: f32[1,96], index: 4, kind: input, shape index: {}]
  %s5 = inlined_call_operand.vmem [shape: f32[1,32], index: 5, kind: input, shape index: {}]
  %s6 = inlined_call_operand.vmem [shape: bf16[16,256], index: 6, kind: output, shape index: {0}]
  %s7 = inlined_call_operand.vmem [shape: f32[16,32], index: 7, kind: output, shape index: {1}]
  %8 = xla_tuple %s6, %s7
  %s9 = sld [smem:[#allocation0]]
  $region50: #{decoder_forward.2} parent=0
    _
  %s11 = ssub.s32 1, %s9
  %s12 = scalar_select 0, %s11, %s9
  // Predicated region
  $region2: #{decoder_forward.2} parent=0 // pred_check
    _
  $region3: #{decoder_forward.2} parent=0 // pred_check_branch
    %14 = sbr.rel (0) target = $region5
  $region4: #{decoder_forward.2} parent=0 // pred_region
    _
  $region5: #{decoder_forward.2} parent=0 // pred_fallthru
    _
  // Predicated region
  $region6: #{decoder_forward.2} parent=0 // pred_check
    _
  $region7: #{decoder_forward.2} parent=0 // pred_check_branch
    %16 = sbr.rel (0) target = $region9
  $region8: #{decoder_forward.2} parent=0 // pred_region
    _
  $region9: #{decoder_forward.2} parent=0 // pred_fallthru
    _
  // Predicated region
  $region10: #{decoder_forward.2} parent=0 // pred_check
    _
  $region11: #{decoder_forward.2} parent=0 // pred_check_branch
    %18 = sbr.rel (0) target = $region13
  $region12: #{decoder_forward.2} parent=0 // pred_region
    _
  $region13: #{decoder_forward.2} parent=0 // pred_fallthru
    _
  // Predicated region
  $region14: #{decoder_forward.2} parent=0 // pred_check
    _
  $region15: #{decoder_forward.2} parent=0 // pred_check_branch
    %20 = sbr.rel (0) target = $region17
  $region16: #{decoder_forward.2} parent=0 // pred_region
    _
  $region17: #{decoder_forward.2} parent=0 // pred_fallthru
    _
  // Predicated region
  $region18: #{decoder_forward.2} parent=0 // pred_check
    _
  $region19: #{decoder_forward.2} parent=0 // pred_check_branch
    %22 = sbr.rel (0) target = $region21
  $region20: #{decoder_forward.2} parent=0 // pred_region
    _
  $region21: #{decoder_forward.2} parent=0 // pred_fallthru
    _
  // Predicated region
  $region22: #{decoder_forward.2} parent=0 // pred_check
    _
  $region23: #{decoder_forward.2} parent=0 // pred_check_branch
    %24 = sbr.rel (0) target = $region25
  $region24: #{decoder_forward.2} parent=0 // pred_region
    _
  $region25: #{decoder_forward.2} parent=0 // pred_fallthru
    _
  %p26 = scmp.eq.s32.totalorder 0, 0
  // Predicated region
  $region26: #{decoder_forward.2} parent=0 // pred_check
    %p27 = pneg %p26
  $region27: #{decoder_forward.2} parent=0 // pred_check_branch
    %29 = sbr.rel (%p27) target = $region29
  $region28: #{decoder_forward.2} parent=0 // pred_region
    %v30 = vld [vmem:[%s1] sm:$0xff]
    %v31 = vld [vmem:[%s1 + $0x8] sm:$0xff]
    %vm32 = vcmask 261120
    %33 = vst.msk [vmem:[#allocation2] sm:$0xff] %vm32, %v30
    %34 = vst.msk [vmem:[#allocation2 + $0x8] sm:$0xff] %vm32, %v31
  $region29: #{decoder_forward.2} parent=0 // pred_fallthru
    _
  %v35 = vld [vmem:[%s2] sm:$0xf]
  %v36 = vld [vmem:[%s2 + $0x4] sm:$0xf]
  %v37 = vld [vmem:[%s2 + $0x8] sm:$0xf]
  %v38 = vld [vmem:[%s2 + $0xc] sm:$0xf]
  %v39 = vld [vmem:[%s3] sm:$0xf]
  %v40 = vld [vmem:[%s3 + $0x4] sm:$0xf]
  %v41 = vld [vmem:[%s3 + $0x8] sm:$0xf]
  %v42 = vld [vmem:[%s3 + $0xc] sm:$0xf]
  %v43 = vld [vmem:[%s5] sm:$0x1]
  %v45 = vlaneseq
  %v46 = vshrl.u32 %v45, 7
  %v47 = vsub.s32 0, %v46
  %v48 = vrot.slane %v43, %v47
  %v49 = vld [vmem:[%s0] sm:$0xf]
  %v50 = vld [vmem:[%s0 + $0x4] sm:$0xf]
  %v51 = vld [vmem:[%s0 + $0x8] sm:$0xf]
  %v52 = vld [vmem:[%s0 + $0xc] sm:$0xf]
  %v53 = vld [vmem:[%s0 + $0x10] sm:$0xf]
  %v54 = vld [vmem:[%s0 + $0x14] sm:$0xf]
  %v55 = vld [vmem:[%s0 + $0x18] sm:$0xf]
  %v56 = vld [vmem:[%s0 + $0x1c] sm:$0xf]
  %v57 = vld [vmem:[%s0 + $0x20] sm:$0xf]
  %v58 = vld [vmem:[%s0 + $0x24] sm:$0xf]
  %v59 = vld [vmem:[%s0 + $0x28] sm:$0xf]
  %v60 = vld [vmem:[%s0 + $0x2c] sm:$0xf]
  %v61 = vld [vmem:[%s0 + $0x30] sm:$0xf]
  %v62 = vld [vmem:[%s0 + $0x34] sm:$0xf]
  %v63 = vld [vmem:[%s0 + $0x38] sm:$0xf]
  %v64 = vld [vmem:[%s0 + $0x3c] sm:$0xf]
  %v65 = vld [vmem:[%s4] sm:$0x1]
  %v67 = vlaneseq
  %v68 = vshrl.u32 %v67, 7
  %v69 = vsub.s32 0, %v68
  %v70 = vrot.slane %v65, %v69
  %v88 = vunpack.c.l.b16 %v49
  %v89 = vunpack.c.l.b16 %v50
  %v90 = vunpack.c.l.b16 %v51
  %v91 = vunpack.c.l.b16 %v52
  %v92 = vunpack.c.l.b16 %v53
  %v93 = vunpack.c.l.b16 %v54
  %v94 = vunpack.c.l.b16 %v55
  %v95 = vunpack.c.l.b16 %v56
  %v96 = vunpack.c.l.b16 %v57
  %v97 = vunpack.c.l.b16 %v58
  %v98 = vunpack.c.l.b16 %v59
  %v99 = vunpack.c.l.b16 %v60
  %v100 = vunpack.c.l.b16 %v61
  %v101 = vunpack.c.l.b16 %v62
  %v102 = vunpack.c.l.b16 %v63
  %v103 = vunpack.c.l.b16 %v64
  %v104 = vpack.c.b16 %v89, %v88
  %v105 = vpack.c.b16 %v91, %v90
  %v106 = vpack.c.b16 %v93, %v92
  %v107 = vpack.c.b16 %v95, %v94
  %v108 = vpack.c.b16 %v97, %v96
  %v109 = vpack.c.b16 %v99, %v98
  %v110 = vpack.c.b16 %v101, %v100
  %v111 = vpack.c.b16 %v103, %v102
  %v116 = vunpack.c.l.b16 %v35
  %v117 = vunpack.c.l.b16 %v36
  %v118 = vunpack.c.l.b16 %v37
  %v119 = vunpack.c.l.b16 %v38
  %v120 = vpack.c.b16 %v117, %v116
  %v121 = vpack.c.b16 %v119, %v118
  %vm124 = vcmask 261120
  %v126 = vsel %vm124, %v104, 0
  %v129 = vsel %vm124, %v105, 0
  %v132 = vsel %vm124, %v106, 0
  %v135 = vsel %vm124, %v107, 0
  %v138 = vsel %vm124, %v108, 0
  %v141 = vsel %vm124, %v109, 0
  %v144 = vsel %vm124, %v110, 0
  %v147 = vsel %vm124, %v111, 0
  %149 = vmatprep.subr.bf16.mxu0 0
  %150 = vmatpush1.bf16.msra.mxu0 0
  %151 = vmatprep.subr.bf16.mxu0 0
  %152 = vmatpush1.bf16.msra.mxu0 0
  %153 = vmatprep.subr.bf16.mxu0 0
  %154 = vmatpush1.bf16.msra.mxu0 0
  %155 = vmatprep.subr.bf16.mxu0 0
  %156 = vmatpush1.bf16.msra.mxu0 0
  %157 = vmatprep.subr.bf16.mxu0 0
  %158 = vmatpush1.bf16.msra.mxu0 0
  %159 = vmatprep.subr.bf16.mxu0 0
  %160 = vmatpush1.bf16.msra.mxu0 0
  %161 = vmatprep.subr.bf16.mxu0 0
  %162 = vmatpush1.bf16.msra.mxu0 %v121
  %163 = vmatprep.subr.bf16.mxu0 0
  %164 = vmatpush1.bf16.msra.mxu0 %v120
  %165 = vmatprep.subr.bf16.mxu0 0
  %166 = vmatpush2.bf16.msra.mxu0 0
  %167 = vmatprep.subr.bf16.mxu0 0
  %168 = vmatpush2.bf16.msra.mxu0 0
  %169 = vmatprep.subr.bf16.mxu0 0
  %170 = vmatpush2.bf16.msra.mxu0 0
  %171 = vmatprep.subr.bf16.mxu0 0
  %172 = vmatpush2.bf16.msra.mxu0 0
  %173 = vmatprep.subr.bf16.mxu0 0
  %174 = vmatpush2.bf16.msra.mxu0 0
  %175 = vmatprep.subr.bf16.mxu0 0
  %176 = vmatpush2.bf16.msra.mxu0 0
  %177 = vmatprep.subr.bf16.mxu0 0
  %178 = vmatpush2.bf16.msra.mxu0 0
  %179 = vmatprep.subr.bf16.mxu0 0
  %180 = vmatpush2.bf16.msra.mxu0 0
  %181 = vmatprep.mubr.bf16.mxu0 0
  %182 = vmatmul.mubr.bf16.gmra.mxu0 %v126
  %v183 = vpop.f32.mrf.mxu0
  %v184 = vadd.f32 %v70, %v183
  %v185 = vpop.f32.mrf.mxu0
  %v186 = vpop.f32.mrf.mxu0
  %v187 = vadd.f32 %v70, %v186
  %v188 = vpop.f32.mrf.mxu0
  %189 = vmatprep.mubr.bf16.mxu0 0
  %190 = vmatmul.mubr.bf16.gmra.mxu0 %v129
  %v191 = vpop.f32.mrf.mxu0
  %v192 = vadd.f32 %v70, %v191
  %v193 = vpop.f32.mrf.mxu0
  %v194 = vpop.f32.mrf.mxu0
  %v195 = vadd.f32 %v70, %v194
  %v196 = vpop.f32.mrf.mxu0
  %197 = vmatprep.mubr.bf16.mxu0 0
  %198 = vmatmul.mubr.bf16.gmra.mxu0 %v132
  %v199 = vpop.f32.mrf.mxu0
  %v200 = vadd.f32 %v70, %v199
  %v201 = vpop.f32.mrf.mxu0
  %v202 = vpop.f32.mrf.mxu0
  %v203 = vadd.f32 %v70, %v202
  %v204 = vpop.f32.mrf.mxu0
  %205 = vmatprep.mubr.bf16.mxu0 0
  %206 = vmatmul.mubr.bf16.gmra.mxu0 %v135
  %v207 = vpop.f32.mrf.mxu0
  %v208 = vadd.f32 %v70, %v207
  %v209 = vpop.f32.mrf.mxu0
  %v210 = vpop.f32.mrf.mxu0
  %v211 = vadd.f32 %v70, %v210
  %v212 = vpop.f32.mrf.mxu0
  %213 = vmatprep.mubr.bf16.mxu0 0
  %214 = vmatmul.mubr.bf16.gmra.mxu0 %v138
  %v215 = vpop.f32.mrf.mxu0
  %v216 = vadd.f32 %v70, %v215
  %v217 = vpop.f32.mrf.mxu0
  %v218 = vpop.f32.mrf.mxu0
  %v219 = vadd.f32 %v70, %v218
  %v220 = vpop.f32.mrf.mxu0
  %221 = vmatprep.mubr.bf16.mxu0 0
  %222 = vmatmul.mubr.bf16.gmra.mxu0 %v141
  %v223 = vpop.f32.mrf.mxu0
  %v224 = vadd.f32 %v70, %v223
  %v225 = vpop.f32.mrf.mxu0
  %v226 = vpop.f32.mrf.mxu0
  %v227 = vadd.f32 %v70, %v226
  %v228 = vpop.f32.mrf.mxu0
  %229 = vmatprep.mubr.bf16.mxu0 0
  %230 = vmatmul.mubr.bf16.gmra.mxu0 %v144
  %v231 = vpop.f32.mrf.mxu0
  %v232 = vadd.f32 %v70, %v231
  %v233 = vpop.f32.mrf.mxu0
  %v234 = vpop.f32.mrf.mxu0
  %v235 = vadd.f32 %v70, %v234
  %v236 = vpop.f32.mrf.mxu0
  %237 = vmatprep.mubr.bf16.mxu0 0
  %238 = vmatmul.mubr.bf16.gmra.mxu0 %v147
  %v239 = vpop.f32.mrf.mxu0
  %v240 = vadd.f32 %v70, %v239
  %v241 = vpop.f32.mrf.mxu0
  %v242 = vpop.f32.mrf.mxu0
  %v243 = vadd.f32 %v70, %v242
  %v244 = vpop.f32.mrf.mxu0
  %245 = vdwg.mxu0
  %v246 = vld [vmem:[#allocation2] sm:$0xff]
  %v247 = vld [vmem:[#allocation2 + $0x8] sm:$0xff]
  %v248 = vpack.c.bf16 %v247, %v246
  %v253 = vunpack.c.l.b16 %v39
  %v254 = vunpack.c.l.b16 %v40
  %v255 = vunpack.c.l.b16 %v41
  %v256 = vunpack.c.l.b16 %v42
  %v257 = vpack.c.b16 %v254, %v253
  %v258 = vpack.c.b16 %v256, %v255
  %v262 = vsel %vm124, %v248, 0
  %264 = vmatprep.subr.bf16.mxu0 0
  %265 = vmatpush1.bf16.msra.mxu0 0
  %266 = vmatprep.subr.bf16.mxu0 0
  %267 = vmatpush1.bf16.msra.mxu0 0
  %268 = vmatprep.subr.bf16.mxu0 0
  %269 = vmatpush1.bf16.msra.mxu0 0
  %270 = vmatprep.subr.bf16.mxu0 0
  %271 = vmatpush1.bf16.msra.mxu0 0
  %272 = vmatprep.subr.bf16.mxu0 0
  %273 = vmatpush1.bf16.msra.mxu0 0
  %274 = vmatprep.subr.bf16.mxu0 0
  %275 = vmatpush1.bf16.msra.mxu0 0
  %276 = vmatprep.subr.bf16.mxu0 0
  %277 = vmatpush1.bf16.msra.mxu0 %v258
  %278 = vmatprep.subr.bf16.mxu0 0
  %279 = vmatpush1.bf16.msra.mxu0 %v257
  %280 = vmatprep.subr.bf16.mxu0 0
  %281 = vmatpush2.bf16.msra.mxu0 0
  %282 = vmatprep.subr.bf16.mxu0 0
  %283 = vmatpush2.bf16.msra.mxu0 0
  %284 = vmatprep.subr.bf16.mxu0 0
  %285 = vmatpush2.bf16.msra.mxu0 0
  %286 = vmatprep.subr.bf16.mxu0 0
  %287 = vmatpush2.bf16.msra.mxu0 0
  %288 = vmatprep.subr.bf16.mxu0 0
  %289 = vmatpush2.bf16.msra.mxu0 0
  %290 = vmatprep.subr.bf16.mxu0 0
  %291 = vmatpush2.bf16.msra.mxu0 0
  %292 = vmatprep.subr.bf16.mxu0 0
  %293 = vmatpush2.bf16.msra.mxu0 0
  %294 = vmatprep.subr.bf16.mxu0 0
  %295 = vmatpush2.bf16.msra.mxu0 0
  %296 = vmatprep.mubr.bf16.mxu0 0
  %297 = vmatmul.mubr.bf16.gmra.mxu0 %v262
  %v298 = vpop.f32.mrf.mxu0
  %v299 = vadd.f32 0.0, %v298
  %v300 = vpop.f32.mrf.mxu0
  %v301 = vpop.f32.mrf.mxu0
  %v302 = vadd.f32 0.0, %v301
  %v303 = vpop.f32.mrf.mxu0
  %304 = vdwg.mxu0
  %v305 = vadd.f32 %v184, %v299
  %v306 = vadd.f32 %v187, %v302
  %v307 = vxor.u32 %v305, 2147483648
  %v308 = vxor.u32 %v306, 2147483648
  %v309 = vmul.f32 %v307, 1.442695
  %v310 = vpow.pop %v309
  %v311 = vmul.f32 %v308, 1.442695
  %v312 = vpow.pop %v311
  %v313 = vadd.f32 %v310, 1.0
  %v314 = vadd.f32 %v312, 1.0
  %v315 = vrcp.pop %v313
  %v316 = vmul.f32 1.0, %v315
  %v317 = vrcp.pop %v314
  %v318 = vmul.f32 1.0, %v317
  %319 = vrot.lane.b32.xlu0 %v48, 64
  %v320 = vpop.permute.xlu0 %319
  %v322 = vadd.f32 %v299, %v320
  %v323 = vadd.f32 %v302, %v320
  %326 = vrot.lane.b32.xlu0 %v322, 64
  %v327 = vpop.permute.xlu0 %326
  %328 = vrot.lane.b32.xlu0 %v323, 64
  %v329 = vpop.permute.xlu0 %328
  %v332 = vmul.f32 %v316, %v327
  %v333 = vmul.f32 %v318, %v329
  %336 = vrot.lane.b32.xlu0 %v332, 64
  %v337 = vpop.permute.xlu0 %336
  %338 = vrot.lane.b32.xlu0 %v333, 64
  %v339 = vpop.permute.xlu0 %338
  %v342 = vadd.f32 %v184, %v337
  %v343 = vadd.f32 %v187, %v339
  %v344 = vtanh.pop %v342
  %v345 = vtanh.pop %v343
  %v346 = vsub.f32 1.0, %v316
  %v347 = vsub.f32 1.0, %v318
  %350 = vrot.lane.b32.xlu0 %v344, 96
  %v351 = vpop.permute.xlu0 %350
  %352 = vrot.lane.b32.xlu0 %v345, 96
  %v353 = vpop.permute.xlu0 %352
  %v356 = vmul.f32 %v346, %v351
  %v357 = vmul.f32 %v347, %v353
  %360 = vrot.lane.b32.xlu0 %v246, 32
  %v361 = vpop.permute.xlu0 %360
  %362 = vrot.lane.b32.xlu0 %v247, 32
  %v363 = vpop.permute.xlu0 %362
  %v366 = vmul.f32 %v316, %v361
  %v367 = vmul.f32 %v318, %v363
  %v368 = vadd.f32 %v356, %v366
  %v369 = vadd.f32 %v357, %v367
  %v370 = vpack.c.bf16 %v369, %v368
  %v372 = vunpack.c.l.b16 %v370
  %v373 = vunpack.c.h.b16 %v370
  %v374 = vpack.c.b16 %v372, %v372
  %v375 = vpack.c.b16 %v373, %v373
  %376 = vrot.lane.b32.xlu0 %v374, 96
  %v377 = vpop.permute.xlu0 %376
  %378 = vrot.lane.b32.xlu0 %v375, 96
  %v379 = vpop.permute.xlu0 %378
  %vm382 = vcmask 257024
  %383 = vst.msk [vmem:[%s6] sm:$0xf] %vm382, %v377
  %384 = vst.msk [vmem:[%s6 + $0x8] sm:$0xf] %vm382, %v379
  %385 = vrot.lane.b32.xlu0 %v370, 96
  %v386 = vpop.permute.xlu0 %385
  %v388 = vsel %vm124, %v386, 0
  %390 = vmatprep.subr.bf16.mxu0 0
  %391 = vmatpush1.bf16.msra.mxu0 0
  %392 = vmatprep.subr.bf16.mxu0 0
  %393 = vmatpush1.bf16.msra.mxu0 0
  %394 = vmatprep.subr.bf16.mxu0 0
  %395 = vmatpush1.bf16.msra.mxu0 0
  %396 = vmatprep.subr.bf16.mxu0 0
  %397 = vmatpush1.bf16.msra.mxu0 0
  %398 = vmatprep.subr.bf16.mxu0 0
  %399 = vmatpush1.bf16.msra.mxu0 0
  %400 = vmatprep.subr.bf16.mxu0 0
  %401 = vmatpush1.bf16.msra.mxu0 0
  %402 = vmatprep.subr.bf16.mxu0 0
  %403 = vmatpush1.bf16.msra.mxu0 %v258
  %404 = vmatprep.subr.bf16.mxu0 0
  %405 = vmatpush1.bf16.msra.mxu0 %v257
  %406 = vmatprep.subr.bf16.mxu0 0
  %407 = vmatpush2.bf16.msra.mxu0 0
  %408 = vmatprep.subr.bf16.mxu0 0
  %409 = vmatpush2.bf16.msra.mxu0 0
  %410 = vmatprep.subr.bf16.mxu0 0
  %411 = vmatpush2.bf16.msra.mxu0 0
  %412 = vmatprep.subr.bf16.mxu0 0
  %413 = vmatpush2.bf16.msra.mxu0 0
  %414 = vmatprep.subr.bf16.mxu0 0
  %415 = vmatpush2.bf16.msra.mxu0 0
  %416 = vmatprep.subr.bf16.mxu0 0
  %417 = vmatpush2.bf16.msra.mxu0 0
  %418 = vmatprep.subr.bf16.mxu0 0
  %419 = vmatpush2.bf16.msra.mxu0 0
  %420 = vmatprep.subr.bf16.mxu0 0
  %421 = vmatpush2.bf16.msra.mxu0 0
  %422 = vmatprep.mubr.bf16.mxu0 0
  %423 = vmatmul.mubr.bf16.gmra.mxu0 %v388
  %v424 = vpop.f32.mrf.mxu0
  %v425 = vadd.f32 0.0, %v424
  %v426 = vpop.f32.mrf.mxu0
  %v427 = vpop.f32.mrf.mxu0
  %v428 = vadd.f32 0.0, %v427
  %v429 = vpop.f32.mrf.mxu0
  %430 = vdwg.mxu0
  %v431 = vadd.f32 %v192, %v425
  %v432 = vadd.f32 %v195, %v428
  %v433 = vxor.u32 %v431, 2147483648
  %v434 = vxor.u32 %v432, 2147483648
  %v435 = vmul.f32 %v433, 1.442695
  %v436 = vpow.pop %v435
  %v437 = vmul.f32 %v434, 1.442695
  %v438 = vpow.pop %v437
  %v439 = vadd.f32 %v436, 1.0
  %v440 = vadd.f32 %v438, 1.0
  %v441 = vrcp.pop %v439
  %v442 = vmul.f32 1.0, %v441
  %v443 = vrcp.pop %v440
  %v444 = vmul.f32 1.0, %v443
  %v445 = vadd.f32 %v425, %v320
  %v446 = vadd.f32 %v428, %v320
  %449 = vrot.lane.b32.xlu0 %v445, 64
  %v450 = vpop.permute.xlu0 %449
  %451 = vrot.lane.b32.xlu0 %v446, 64
  %v452 = vpop.permute.xlu0 %451
  %v455 = vmul.f32 %v442, %v450
  %v456 = vmul.f32 %v444, %v452
  %459 = vrot.lane.b32.xlu0 %v455, 64
  %v460 = vpop.permute.xlu0 %459
  %461 = vrot.lane.b32.xlu0 %v456, 64
  %v462 = vpop.permute.xlu0 %461
  %v465 = vadd.f32 %v192, %v460
  %v466 = vadd.f32 %v195, %v462
  %v467 = vtanh.pop %v465
  %v468 = vtanh.pop %v466
  %v469 = vsub.f32 1.0, %v442
  %v470 = vsub.f32 1.0, %v444
  %473 = vrot.lane.b32.xlu0 %v467, 96
  %v474 = vpop.permute.xlu0 %473
  %475 = vrot.lane.b32.xlu0 %v468, 96
  %v476 = vpop.permute.xlu0 %475
  %v479 = vmul.f32 %v469, %v474
  %v480 = vmul.f32 %v470, %v476
  %v481 = vmul.f32 %v442, %v368
  %v482 = vmul.f32 %v444, %v369
  %v483 = vadd.f32 %v479, %v481
  %v484 = vadd.f32 %v480, %v482
  %v485 = vpack.c.bf16 %v484, %v483
  %v487 = vunpack.c.l.b16 %v485
  %v488 = vunpack.c.h.b16 %v485
  %v489 = vpack.c.b16 %v487, %v487
  %v490 = vpack.c.b16 %v488, %v488
  %vm493 = vcmask 519424
  %494 = vst.msk [vmem:[%s6] sm:$0xf] %vm493, %v489
  %495 = vst.msk [vmem:[%s6 + $0x8] sm:$0xf] %vm493, %v490
  %496 = vrot.lane.b32.xlu0 %v485, 96
  %v497 = vpop.permute.xlu0 %496
  %v499 = vsel %vm124, %v497, 0
  %501 = vmatprep.subr.bf16.mxu0 0
  %502 = vmatpush1.bf16.msra.mxu0 0
  %503 = vmatprep.subr.bf16.mxu0 0
  %504 = vmatpush1.bf16.msra.mxu0 0
  %505 = vmatprep.subr.bf16.mxu0 0
  %506 = vmatpush1.bf16.msra.mxu0 0
  %507 = vmatprep.subr.bf16.mxu0 0
  %508 = vmatpush1.bf16.msra.mxu0 0
  %509 = vmatprep.subr.bf16.mxu0 0
  %510 = vmatpush1.bf16.msra.mxu0 0
  %511 = vmatprep.subr.bf16.mxu0 0
  %512 = vmatpush1.bf16.msra.mxu0 0
  %513 = vmatprep.subr.bf16.mxu0 0
  %514 = vmatpush1.bf16.msra.mxu0 %v258
  %515 = vmatprep.subr.bf16.mxu0 0
  %516 = vmatpush1.bf16.msra.mxu0 %v257
  %517 = vmatprep.subr.bf16.mxu0 0
  %518 = vmatpush2.bf16.msra.mxu0 0
  %519 = vmatprep.subr.bf16.mxu0 0
  %520 = vmatpush2.bf16.msra.mxu0 0
  %521 = vmatprep.subr.bf16.mxu0 0
  %522 = vmatpush2.bf16.msra.mxu0 0
  %523 = vmatprep.subr.bf16.mxu0 0
  %524 = vmatpush2.bf16.msra.mxu0 0
  %525 = vmatprep.subr.bf16.mxu0 0
  %526 = vmatpush2.bf16.msra.mxu0 0
  %527 = vmatprep.subr.bf16.mxu0 0
  %528 = vmatpush2.bf16.msra.mxu0 0
  %529 = vmatprep.subr.bf16.mxu0 0
  %530 = vmatpush2.bf16.msra.mxu0 0
  %531 = vmatprep.subr.bf16.mxu0 0
  %532 = vmatpush2.bf16.msra.mxu0 0
  %533 = vmatprep.mubr.bf16.mxu0 0
  %534 = vmatmul.mubr.bf16.gmra.mxu0 %v499
  %v535 = vpop.f32.mrf.mxu0
  %v536 = vadd.f32 0.0, %v535
  %v537 = vpop.f32.mrf.mxu0
  %v538 = vpop.f32.mrf.mxu0
  %v539 = vadd.f32 0.0, %v538
  %v540 = vpop.f32.mrf.mxu0
  %541 = vdwg.mxu0
  %v542 = vadd.f32 %v200, %v536
  %v543 = vadd.f32 %v203, %v539
  %v544 = vxor.u32 %v542, 2147483648
  %v545 = vxor.u32 %v543, 2147483648
  %v546 = vmul.f32 %v544, 1.442695
  %v547 = vpow.pop %v546
  %v548 = vmul.f32 %v545, 1.442695
  %v549 = vpow.pop %v548
  %v550 = vadd.f32 %v547, 1.0
  %v551 = vadd.f32 %v549, 1.0
  %v552 = vrcp.pop %v550
  %v553 = vmul.f32 1.0, %v552
  %v554 = vrcp.pop %v551
  %v555 = vmul.f32 1.0, %v554
  %v556 = vadd.f32 %v536, %v320
  %v557 = vadd.f32 %v539, %v320
  %560 = vrot.lane.b32.xlu0 %v556, 64
  %v561 = vpop.permute.xlu0 %560
  %562 = vrot.lane.b32.xlu0 %v557, 64
  %v563 = vpop.permute.xlu0 %562
  %v566 = vmul.f32 %v553, %v561
  %v567 = vmul.f32 %v555, %v563
  %570 = vrot.lane.b32.xlu0 %v566, 64
  %v571 = vpop.permute.xlu0 %570
  %572 = vrot.lane.b32.xlu0 %v567, 64
  %v573 = vpop.permute.xlu0 %572
  %v576 = vadd.f32 %v200, %v571
  %v577 = vadd.f32 %v203, %v573
  %v578 = vtanh.pop %v576
  %v579 = vtanh.pop %v577
  %v580 = vsub.f32 1.0, %v553
  %v581 = vsub.f32 1.0, %v555
  %584 = vrot.lane.b32.xlu0 %v578, 96
  %v585 = vpop.permute.xlu0 %584
  %586 = vrot.lane.b32.xlu0 %v579, 96
  %v587 = vpop.permute.xlu0 %586
  %v590 = vmul.f32 %v580, %v585
  %v591 = vmul.f32 %v581, %v587
  %v592 = vmul.f32 %v553, %v483
  %v593 = vmul.f32 %v555, %v484
  %v594 = vadd.f32 %v590, %v592
  %v595 = vadd.f32 %v591, %v593
  %v596 = vpack.c.bf16 %v595, %v594
  %v598 = vunpack.c.l.b16 %v596
  %v599 = vunpack.c.h.b16 %v596
  %v600 = vpack.c.b16 %v598, %v598
  %v601 = vpack.c.b16 %v599, %v599
  %602 = vrot.lane.b32.xlu0 %v600, 32
  %v603 = vpop.permute.xlu0 %602
  %604 = vrot.lane.b32.xlu0 %v601, 32
  %v605 = vpop.permute.xlu0 %604
  %vm608 = vcmask 781824
  %609 = vst.msk [vmem:[%s6] sm:$0xf] %vm608, %v603
  %610 = vst.msk [vmem:[%s6 + $0x8] sm:$0xf] %vm608, %v605
  %611 = vrot.lane.b32.xlu0 %v596, 96
  %v612 = vpop.permute.xlu0 %611
  %v614 = vsel %vm124, %v612, 0
  %616 = vmatprep.subr.bf16.mxu0 0
  %617 = vmatpush1.bf16.msra.mxu0 0
  %618 = vmatprep.subr.bf16.mxu0 0
  %619 = vmatpush1.bf16.msra.mxu0 0
  %620 = vmatprep.subr.bf16.mxu0 0
  %621 = vmatpush1.bf16.msra.mxu0 0
  %622 = vmatprep.subr.bf16.mxu0 0
  %623 = vmatpush1.bf16.msra.mxu0 0
  %624 = vmatprep.subr.bf16.mxu0 0
  %625 = vmatpush1.bf16.msra.mxu0 0
  %626 = vmatprep.subr.bf16.mxu0 0
  %627 = vmatpush1.bf16.msra.mxu0 0
  %628 = vmatprep.subr.bf16.mxu0 0
  %629 = vmatpush1.bf16.msra.mxu0 %v258
  %630 = vmatprep.subr.bf16.mxu0 0
  %631 = vmatpush1.bf16.msra.mxu0 %v257
  %632 = vmatprep.subr.bf16.mxu0 0
  %633 = vmatpush2.bf16.msra.mxu0 0
  %634 = vmatprep.subr.bf16.mxu0 0
  %635 = vmatpush2.bf16.msra.mxu0 0
  %636 = vmatprep.subr.bf16.mxu0 0
  %637 = vmatpush2.bf16.msra.mxu0 0
  %638 = vmatprep.subr.bf16.mxu0 0
  %639 = vmatpush2.bf16.msra.mxu0 0
  %640 = vmatprep.subr.bf16.mxu0 0
  %641 = vmatpush2.bf16.msra.mxu0 0
  %642 = vmatprep.subr.bf16.mxu0 0
  %643 = vmatpush2.bf16.msra.mxu0 0
  %644 = vmatprep.subr.bf16.mxu0 0
  %645 = vmatpush2.bf16.msra.mxu0 0
  %646 = vmatprep.subr.bf16.mxu0 0
  %647 = vmatpush2.bf16.msra.mxu0 0
  %648 = vmatprep.mubr.bf16.mxu0 0
  %649 = vmatmul.mubr.bf16.gmra.mxu0 %v614
  %v650 = vpop.f32.mrf.mxu0
  %v651 = vadd.f32 0.0, %v650
  %v652 = vpop.f32.mrf.mxu0
  %v653 = vpop.f32.mrf.mxu0
  %v654 = vadd.f32 0.0, %v653
  %v655 = vpop.f32.mrf.mxu0
  %656 = vdwg.mxu0
  %v657 = vadd.f32 %v208, %v651
  %v658 = vadd.f32 %v211, %v654
  %v659 = vxor.u32 %v657, 2147483648
  %v660 = vxor.u32 %v658, 2147483648
  %v661 = vmul.f32 %v659, 1.442695
  %v662 = vpow.pop %v661
  %v663 = vmul.f32 %v660, 1.442695
  %v664 = vpow.pop %v663
  %v665 = vadd.f32 %v662, 1.0
  %v666 = vadd.f32 %v664, 1.0
  %v667 = vrcp.pop %v665
  %v668 = vmul.f32 1.0, %v667
  %v669 = vrcp.pop %v666
  %v670 = vmul.f32 1.0, %v669
  %v671 = vadd.f32 %v651, %v320
  %v672 = vadd.f32 %v654, %v320
  %675 = vrot.lane.b32.xlu0 %v671, 64
  %v676 = vpop.permute.xlu0 %675
  %677 = vrot.lane.b32.xlu0 %v672, 64
  %v678 = vpop.permute.xlu0 %677
  %v681 = vmul.f32 %v668, %v676
  %v682 = vmul.f32 %v670, %v678
  %685 = vrot.lane.b32.xlu0 %v681, 64
  %v686 = vpop.permute.xlu0 %685
  %687 = vrot.lane.b32.xlu0 %v682, 64
  %v688 = vpop.permute.xlu0 %687
  %v691 = vadd.f32 %v208, %v686
  %v692 = vadd.f32 %v211, %v688
  %v693 = vtanh.pop %v691
  %v694 = vtanh.pop %v692
  %v695 = vsub.f32 1.0, %v668
  %v696 = vsub.f32 1.0, %v670
  %699 = vrot.lane.b32.xlu0 %v693, 96
  %v700 = vpop.permute.xlu0 %699
  %701 = vrot.lane.b32.xlu0 %v694, 96
  %v702 = vpop.permute.xlu0 %701
  %v705 = vmul.f32 %v695, %v700
  %v706 = vmul.f32 %v696, %v702
  %v707 = vmul.f32 %v668, %v594
  %v708 = vmul.f32 %v670, %v595
  %v709 = vadd.f32 %v705, %v707
  %v710 = vadd.f32 %v706, %v708
  %v711 = vpack.c.bf16 %v710, %v709
  %v713 = vunpack.c.l.b16 %v711
  %v714 = vunpack.c.h.b16 %v711
  %v715 = vpack.c.b16 %v713, %v713
  %v716 = vpack.c.b16 %v714, %v714
  %717 = vrot.lane.b32.xlu0 %v715, 64
  %v718 = vpop.permute.xlu0 %717
  %719 = vrot.lane.b32.xlu0 %v716, 64
  %v720 = vpop.permute.xlu0 %719
  %vm723 = vcmask 1044224
  %724 = vst.msk [vmem:[%s6] sm:$0xf] %vm723, %v718
  %725 = vst.msk [vmem:[%s6 + $0x8] sm:$0xf] %vm723, %v720
  %726 = vrot.lane.b32.xlu0 %v711, 96
  %v727 = vpop.permute.xlu0 %726
  %v729 = vsel %vm124, %v727, 0
  %731 = vmatprep.subr.bf16.mxu0 0
  %732 = vmatpush1.bf16.msra.mxu0 0
  %733 = vmatprep.subr.bf16.mxu0 0
  %734 = vmatpush1.bf16.msra.mxu0 0
  %735 = vmatprep.subr.bf16.mxu0 0
  %736 = vmatpush1.bf16.msra.mxu0 0
  %737 = vmatprep.subr.bf16.mxu0 0
  %738 = vmatpush1.bf16.msra.mxu0 0
  %739 = vmatprep.subr.bf16.mxu0 0
  %740 = vmatpush1.bf16.msra.mxu0 0
  %741 = vmatprep.subr.bf16.mxu0 0
  %742 = vmatpush1.bf16.msra.mxu0 0
  %743 = vmatprep.subr.bf16.mxu0 0
  %744 = vmatpush1.bf16.msra.mxu0 %v258
  %745 = vmatprep.subr.bf16.mxu0 0
  %746 = vmatpush1.bf16.msra.mxu0 %v257
  %747 = vmatprep.subr.bf16.mxu0 0
  %748 = vmatpush2.bf16.msra.mxu0 0
  %749 = vmatprep.subr.bf16.mxu0 0
  %750 = vmatpush2.bf16.msra.mxu0 0
  %751 = vmatprep.subr.bf16.mxu0 0
  %752 = vmatpush2.bf16.msra.mxu0 0
  %753 = vmatprep.subr.bf16.mxu0 0
  %754 = vmatpush2.bf16.msra.mxu0 0
  %755 = vmatprep.subr.bf16.mxu0 0
  %756 = vmatpush2.bf16.msra.mxu0 0
  %757 = vmatprep.subr.bf16.mxu0 0
  %758 = vmatpush2.bf16.msra.mxu0 0
  %759 = vmatprep.subr.bf16.mxu0 0
  %760 = vmatpush2.bf16.msra.mxu0 0
  %761 = vmatprep.subr.bf16.mxu0 0
  %762 = vmatpush2.bf16.msra.mxu0 0
  %763 = vmatprep.mubr.bf16.mxu0 0
  %764 = vmatmul.mubr.bf16.gmra.mxu0 %v729
  %v765 = vpop.f32.mrf.mxu0
  %v766 = vadd.f32 0.0, %v765
  %v767 = vpop.f32.mrf.mxu0
  %v768 = vpop.f32.mrf.mxu0
  %v769 = vadd.f32 0.0, %v768
  %v770 = vpop.f32.mrf.mxu0
  %771 = vdwg.mxu0
  %v772 = vadd.f32 %v216, %v766
  %v773 = vadd.f32 %v219, %v769
  %v774 = vxor.u32 %v772, 2147483648
  %v775 = vxor.u32 %v773, 2147483648
  %v776 = vmul.f32 %v774, 1.442695
  %v777 = vpow.pop %v776
  %v778 = vmul.f32 %v775, 1.442695
  %v779 = vpow.pop %v778
  %v780 = vadd.f32 %v777, 1.0
  %v781 = vadd.f32 %v779, 1.0
  %v782 = vrcp.pop %v780
  %v783 = vmul.f32 1.0, %v782
  %v784 = vrcp.pop %v781
  %v785 = vmul.f32 1.0, %v784
  %v786 = vadd.f32 %v766, %v320
  %v787 = vadd.f32 %v769, %v320
  %790 = vrot.lane.b32.xlu0 %v786, 64
  %v791 = vpop.permute.xlu0 %790
  %792 = vrot.lane.b32.xlu0 %v787, 64
  %v793 = vpop.permute.xlu0 %792
  %v796 = vmul.f32 %v783, %v791
  %v797 = vmul.f32 %v785, %v793
  %800 = vrot.lane.b32.xlu0 %v796, 64
  %v801 = vpop.permute.xlu0 %800
  %802 = vrot.lane.b32.xlu0 %v797, 64
  %v803 = vpop.permute.xlu0 %802
  %v806 = vadd.f32 %v216, %v801
  %v807 = vadd.f32 %v219, %v803
  %v808 = vtanh.pop %v806
  %v809 = vtanh.pop %v807
  %v810 = vsub.f32 1.0, %v783
  %v811 = vsub.f32 1.0, %v785
  %814 = vrot.lane.b32.xlu0 %v808, 96
  %v815 = vpop.permute.xlu0 %814
  %816 = vrot.lane.b32.xlu0 %v809, 96
  %v817 = vpop.permute.xlu0 %816
  %v820 = vmul.f32 %v810, %v815
  %v821 = vmul.f32 %v811, %v817
  %v822 = vmul.f32 %v783, %v709
  %v823 = vmul.f32 %v785, %v710
  %v824 = vadd.f32 %v820, %v822
  %v825 = vadd.f32 %v821, %v823
  %v826 = vpack.c.bf16 %v825, %v824
  %v828 = vunpack.c.l.b16 %v826
  %v829 = vunpack.c.h.b16 %v826
  %v830 = vpack.c.b16 %v828, %v828
  %v831 = vpack.c.b16 %v829, %v829
  %832 = vrot.lane.b32.xlu0 %v830, 96
  %v833 = vpop.permute.xlu0 %832
  %834 = vrot.lane.b32.xlu0 %v831, 96
  %v835 = vpop.permute.xlu0 %834
  %838 = vst.msk [vmem:[%s6 + $0x4] sm:$0xf] %vm382, %v833
  %839 = vst.msk [vmem:[%s6 + $0xc] sm:$0xf] %vm382, %v835
  %840 = vrot.lane.b32.xlu0 %v826, 96
  %v841 = vpop.permute.xlu0 %840
  %v843 = vsel %vm124, %v841, 0
  %845 = vmatprep.subr.bf16.mxu0 0
  %846 = vmatpush1.bf16.msra.mxu0 0
  %847 = vmatprep.subr.bf16.mxu0 0
  %848 = vmatpush1.bf16.msra.mxu0 0
  %849 = vmatprep.subr.bf16.mxu0 0
  %850 = vmatpush1.bf16.msra.mxu0 0
  %851 = vmatprep.subr.bf16.mxu0 0
  %852 = vmatpush1.bf16.msra.mxu0 0
  %853 = vmatprep.subr.bf16.mxu0 0
  %854 = vmatpush1.bf16.msra.mxu0 0
  %855 = vmatprep.subr.bf16.mxu0 0
  %856 = vmatpush1.bf16.msra.mxu0 0
  %857 = vmatprep.subr.bf16.mxu0 0
  %858 = vmatpush1.bf16.msra.mxu0 %v258
  %859 = vmatprep.subr.bf16.mxu0 0
  %860 = vmatpush1.bf16.msra.mxu0 %v257
  %861 = vmatprep.subr.bf16.mxu0 0
  %862 = vmatpush2.bf16.msra.mxu0 0
  %863 = vmatprep.subr.bf16.mxu0 0
  %864 = vmatpush2.bf16.msra.mxu0 0
  %865 = vmatprep.subr.bf16.mxu0 0
  %866 = vmatpush2.bf16.msra.mxu0 0
  %867 = vmatprep.subr.bf16.mxu0 0
  %868 = vmatpush2.bf16.msra.mxu0 0
  %869 = vmatprep.subr.bf16.mxu0 0
  %870 = vmatpush2.bf16.msra.mxu0 0
  %871 = vmatprep.subr.bf16.mxu0 0
  %872 = vmatpush2.bf16.msra.mxu0 0
  %873 = vmatprep.subr.bf16.mxu0 0
  %874 = vmatpush2.bf16.msra.mxu0 0
  %875 = vmatprep.subr.bf16.mxu0 0
  %876 = vmatpush2.bf16.msra.mxu0 0
  %877 = vmatprep.mubr.bf16.mxu0 0
  %878 = vmatmul.mubr.bf16.gmra.mxu0 %v843
  %v879 = vpop.f32.mrf.mxu0
  %v880 = vadd.f32 0.0, %v879
  %v881 = vpop.f32.mrf.mxu0
  %v882 = vpop.f32.mrf.mxu0
  %v883 = vadd.f32 0.0, %v882
  %v884 = vpop.f32.mrf.mxu0
  %885 = vdwg.mxu0
  %v886 = vadd.f32 %v224, %v880
  %v887 = vadd.f32 %v227, %v883
  %v888 = vxor.u32 %v886, 2147483648
  %v889 = vxor.u32 %v887, 2147483648
  %v890 = vmul.f32 %v888, 1.442695
  %v891 = vpow.pop %v890
  %v892 = vmul.f32 %v889, 1.442695
  %v893 = vpow.pop %v892
  %v894 = vadd.f32 %v891, 1.0
  %v895 = vadd.f32 %v893, 1.0
  %v896 = vrcp.pop %v894
  %v897 = vmul.f32 1.0, %v896
  %v898 = vrcp.pop %v895
  %v899 = vmul.f32 1.0, %v898
  %v900 = vadd.f32 %v880, %v320
  %v901 = vadd.f32 %v883, %v320
  %904 = vrot.lane.b32.xlu0 %v900, 64
  %v905 = vpop.permute.xlu0 %904
  %906 = vrot.lane.b32.xlu0 %v901, 64
  %v907 = vpop.permute.xlu0 %906
  %v910 = vmul.f32 %v897, %v905
  %v911 = vmul.f32 %v899, %v907
  %914 = vrot.lane.b32.xlu0 %v910, 64
  %v915 = vpop.permute.xlu0 %914
  %916 = vrot.lane.b32.xlu0 %v911, 64
  %v917 = vpop.permute.xlu0 %916
  %v920 = vadd.f32 %v224, %v915
  %v921 = vadd.f32 %v227, %v917
  %v922 = vtanh.pop %v920
  %v923 = vtanh.pop %v921
  %v924 = vsub.f32 1.0, %v897
  %v925 = vsub.f32 1.0, %v899
  %928 = vrot.lane.b32.xlu0 %v922, 96
  %v929 = vpop.permute.xlu0 %928
  %930 = vrot.lane.b32.xlu0 %v923, 96
  %v931 = vpop.permute.xlu0 %930
  %v934 = vmul.f32 %v924, %v929
  %v935 = vmul.f32 %v925, %v931
  %v936 = vmul.f32 %v897, %v824
  %v937 = vmul.f32 %v899, %v825
  %v938 = vadd.f32 %v934, %v936
  %v939 = vadd.f32 %v935, %v937
  %v940 = vpack.c.bf16 %v939, %v938
  %v942 = vunpack.c.l.b16 %v940
  %v943 = vunpack.c.h.b16 %v940
  %v944 = vpack.c.b16 %v942, %v942
  %v945 = vpack.c.b16 %v943, %v943
  %948 = vst.msk [vmem:[%s6 + $0x4] sm:$0xf] %vm493, %v944
  %949 = vst.msk [vmem:[%s6 + $0xc] sm:$0xf] %vm493, %v945
  %950 = vrot.lane.b32.xlu0 %v940, 96
  %v951 = vpop.permute.xlu0 %950
  %v953 = vsel %vm124, %v951, 0
  %955 = vmatprep.subr.bf16.mxu0 0
  %956 = vmatpush1.bf16.msra.mxu0 0
  %957 = vmatprep.subr.bf16.mxu0 0
  %958 = vmatpush1.bf16.msra.mxu0 0
  %959 = vmatprep.subr.bf16.mxu0 0
  %960 = vmatpush1.bf16.msra.mxu0 0
  %961 = vmatprep.subr.bf16.mxu0 0
  %962 = vmatpush1.bf16.msra.mxu0 0
  %963 = vmatprep.subr.bf16.mxu0 0
  %964 = vmatpush1.bf16.msra.mxu0 0
  %965 = vmatprep.subr.bf16.mxu0 0
  %966 = vmatpush1.bf16.msra.mxu0 0
  %967 = vmatprep.subr.bf16.mxu0 0
  %968 = vmatpush1.bf16.msra.mxu0 %v258
  %969 = vmatprep.subr.bf16.mxu0 0
  %970 = vmatpush1.bf16.msra.mxu0 %v257
  %971 = vmatprep.subr.bf16.mxu0 0
  %972 = vmatpush2.bf16.msra.mxu0 0
  %973 = vmatprep.subr.bf16.mxu0 0
  %974 = vmatpush2.bf16.msra.mxu0 0
  %975 = vmatprep.subr.bf16.mxu0 0
  %976 = vmatpush2.bf16.msra.mxu0 0
  %977 = vmatprep.subr.bf16.mxu0 0
  %978 = vmatpush2.bf16.msra.mxu0 0
  %979 = vmatprep.subr.bf16.mxu0 0
  %980 = vmatpush2.bf16.msra.mxu0 0
  %981 = vmatprep.subr.bf16.mxu0 0
  %982 = vmatpush2.bf16.msra.mxu0 0
  %983 = vmatprep.subr.bf16.mxu0 0
  %984 = vmatpush2.bf16.msra.mxu0 0
  %985 = vmatprep.subr.bf16.mxu0 0
  %986 = vmatpush2.bf16.msra.mxu0 0
  %987 = vmatprep.mubr.bf16.mxu0 0
  %988 = vmatmul.mubr.bf16.gmra.mxu0 %v953
  %v989 = vpop.f32.mrf.mxu0
  %v990 = vadd.f32 0.0, %v989
  %v991 = vpop.f32.mrf.mxu0
  %v992 = vpop.f32.mrf.mxu0
  %v993 = vadd.f32 0.0, %v992
  %v994 = vpop.f32.mrf.mxu0
  %995 = vdwg.mxu0
  %v996 = vadd.f32 %v232, %v990
  %v997 = vadd.f32 %v235, %v993
  %v998 = vxor.u32 %v996, 2147483648
  %v999 = vxor.u32 %v997, 2147483648
  %v1000 = vmul.f32 %v998, 1.442695
  %v1001 = vpow.pop %v1000
  %v1002 = vmul.f32 %v999, 1.442695
  %v1003 = vpow.pop %v1002
  %v1004 = vadd.f32 %v1001, 1.0
  %v1005 = vadd.f32 %v1003, 1.0
  %v1006 = vrcp.pop %v1004
  %v1007 = vmul.f32 1.0, %v1006
  %v1008 = vrcp.pop %v1005
  %v1009 = vmul.f32 1.0, %v1008
  %v1010 = vadd.f32 %v990, %v320
  %v1011 = vadd.f32 %v993, %v320
  %1014 = vrot.lane.b32.xlu0 %v1010, 64
  %v1015 = vpop.permute.xlu0 %1014
  %1016 = vrot.lane.b32.xlu0 %v1011, 64
  %v1017 = vpop.permute.xlu0 %1016
  %v1020 = vmul.f32 %v1007, %v1015
  %v1021 = vmul.f32 %v1009, %v1017
  %1024 = vrot.lane.b32.xlu0 %v1020, 64
  %v1025 = vpop.permute.xlu0 %1024
  %1026 = vrot.lane.b32.xlu0 %v1021, 64
  %v1027 = vpop.permute.xlu0 %1026
  %v1030 = vadd.f32 %v232, %v1025
  %v1031 = vadd.f32 %v235, %v1027
  %v1032 = vtanh.pop %v1030
  %v1033 = vtanh.pop %v1031
  %v1034 = vsub.f32 1.0, %v1007
  %v1035 = vsub.f32 1.0, %v1009
  %1038 = vrot.lane.b32.xlu0 %v1032, 96
  %v1039 = vpop.permute.xlu0 %1038
  %1040 = vrot.lane.b32.xlu0 %v1033, 96
  %v1041 = vpop.permute.xlu0 %1040
  %v1044 = vmul.f32 %v1034, %v1039
  %v1045 = vmul.f32 %v1035, %v1041
  %v1046 = vmul.f32 %v1007, %v938
  %v1047 = vmul.f32 %v1009, %v939
  %v1048 = vadd.f32 %v1044, %v1046
  %v1049 = vadd.f32 %v1045, %v1047
  %v1050 = vpack.c.bf16 %v1049, %v1048
  %v1052 = vunpack.c.l.b16 %v1050
  %v1053 = vunpack.c.h.b16 %v1050
  %v1054 = vpack.c.b16 %v1052, %v1052
  %v1055 = vpack.c.b16 %v1053, %v1053
  %1056 = vrot.lane.b32.xlu0 %v1054, 32
  %v1057 = vpop.permute.xlu0 %1056
  %1058 = vrot.lane.b32.xlu0 %v1055, 32
  %v1059 = vpop.permute.xlu0 %1058
  %1062 = vst.msk [vmem:[%s6 + $0x4] sm:$0xf] %vm608, %v1057
  %1063 = vst.msk [vmem:[%s6 + $0xc] sm:$0xf] %vm608, %v1059
  %1064 = vrot.lane.b32.xlu0 %v1050, 96
  %v1065 = vpop.permute.xlu0 %1064
  %v1067 = vsel %vm124, %v1065, 0
  %1069 = vmatprep.subr.bf16.mxu0 0
  %1070 = vmatpush1.bf16.msra.mxu0 0
  %1071 = vmatprep.subr.bf16.mxu0 0
  %1072 = vmatpush1.bf16.msra.mxu0 0
  %1073 = vmatprep.subr.bf16.mxu0 0
  %1074 = vmatpush1.bf16.msra.mxu0 0
  %1075 = vmatprep.subr.bf16.mxu0 0
  %1076 = vmatpush1.bf16.msra.mxu0 0
  %1077 = vmatprep.subr.bf16.mxu0 0
  %1078 = vmatpush1.bf16.msra.mxu0 0
  %1079 = vmatprep.subr.bf16.mxu0 0
  %1080 = vmatpush1.bf16.msra.mxu0 0
  %1081 = vmatprep.subr.bf16.mxu0 0
  %1082 = vmatpush1.bf16.msra.mxu0 %v258
  %1083 = vmatprep.subr.bf16.mxu0 0
  %1084 = vmatpush1.bf16.msra.mxu0 %v257
  %1085 = vmatprep.subr.bf16.mxu0 0
  %1086 = vmatpush2.bf16.msra.mxu0 0
  %1087 = vmatprep.subr.bf16.mxu0 0
  %1088 = vmatpush2.bf16.msra.mxu0 0
  %1089 = vmatprep.subr.bf16.mxu0 0
  %1090 = vmatpush2.bf16.msra.mxu0 0
  %1091 = vmatprep.subr.bf16.mxu0 0
  %1092 = vmatpush2.bf16.msra.mxu0 0
  %1093 = vmatprep.subr.bf16.mxu0 0
  %1094 = vmatpush2.bf16.msra.mxu0 0
  %1095 = vmatprep.subr.bf16.mxu0 0
  %1096 = vmatpush2.bf16.msra.mxu0 0
  %1097 = vmatprep.subr.bf16.mxu0 0
  %1098 = vmatpush2.bf16.msra.mxu0 0
  %1099 = vmatprep.subr.bf16.mxu0 0
  %1100 = vmatpush2.bf16.msra.mxu0 0
  %1101 = vmatprep.mubr.bf16.mxu0 0
  %1102 = vmatmul.mubr.bf16.gmra.mxu0 %v1067
  %v1103 = vpop.f32.mrf.mxu0
  %v1104 = vadd.f32 0.0, %v1103
  %v1105 = vpop.f32.mrf.mxu0
  %v1106 = vpop.f32.mrf.mxu0
  %v1107 = vadd.f32 0.0, %v1106
  %v1108 = vpop.f32.mrf.mxu0
  %1109 = vdwg.mxu0
  %v1110 = vadd.f32 %v240, %v1104
  %v1111 = vadd.f32 %v243, %v1107
  %v1112 = vxor.u32 %v1110, 2147483648
  %v1113 = vxor.u32 %v1111, 2147483648
  %v1114 = vmul.f32 %v1112, 1.442695
  %v1115 = vpow.pop %v1114
  %v1116 = vmul.f32 %v1113, 1.442695
  %v1117 = vpow.pop %v1116
  %v1118 = vadd.f32 %v1115, 1.0
  %v1119 = vadd.f32 %v1117, 1.0
  %v1120 = vrcp.pop %v1118
  %v1121 = vmul.f32 1.0, %v1120
  %v1122 = vrcp.pop %v1119
  %v1123 = vmul.f32 1.0, %v1122
  %v1124 = vadd.f32 %v1104, %v320
  %v1125 = vadd.f32 %v1107, %v320
  %1128 = vrot.lane.b32.xlu0 %v1124, 64
  %v1129 = vpop.permute.xlu0 %1128
  %1130 = vrot.lane.b32.xlu0 %v1125, 64
  %v1131 = vpop.permute.xlu0 %1130
  %v1134 = vmul.f32 %v1121, %v1129
  %v1135 = vmul.f32 %v1123, %v1131
  %1138 = vrot.lane.b32.xlu0 %v1134, 64
  %v1139 = vpop.permute.xlu0 %1138
  %1140 = vrot.lane.b32.xlu0 %v1135, 64
  %v1141 = vpop.permute.xlu0 %1140
  %v1144 = vadd.f32 %v240, %v1139
  %v1145 = vadd.f32 %v243, %v1141
  %v1146 = vtanh.pop %v1144
  %v1147 = vtanh.pop %v1145
  %v1148 = vsub.f32 1.0, %v1121
  %v1149 = vsub.f32 1.0, %v1123
  %1152 = vrot.lane.b32.xlu0 %v1146, 96
  %v1153 = vpop.permute.xlu0 %1152
  %1154 = vrot.lane.b32.xlu0 %v1147, 96
  %v1155 = vpop.permute.xlu0 %1154
  %v1158 = vmul.f32 %v1148, %v1153
  %v1159 = vmul.f32 %v1149, %v1155
  %v1160 = vmul.f32 %v1121, %v1048
  %v1161 = vmul.f32 %v1123, %v1049
  %v1162 = vadd.f32 %v1158, %v1160
  %v1163 = vadd.f32 %v1159, %v1161
  %v1164 = vpack.c.bf16 %v1163, %v1162
  %v1166 = vunpack.c.l.b16 %v1164
  %v1167 = vunpack.c.h.b16 %v1164
  %v1168 = vpack.c.b16 %v1166, %v1166
  %v1169 = vpack.c.b16 %v1167, %v1167
  %1170 = vrot.lane.b32.xlu0 %v1168, 64
  %v1171 = vpop.permute.xlu0 %1170
  %1172 = vrot.lane.b32.xlu0 %v1169, 64
  %v1173 = vpop.permute.xlu0 %1172
  %1176 = vst.msk [vmem:[%s6 + $0x4] sm:$0xf] %vm723, %v1171
  %1177 = vst.msk [vmem:[%s6 + $0xc] sm:$0xf] %vm723, %v1173
  %1180 = vrot.lane.b32.xlu0 %v1162, 96
  %v1181 = vpop.permute.xlu0 %1180
  %1182 = vrot.lane.b32.xlu0 %v1163, 96
  %v1183 = vpop.permute.xlu0 %1182
  %1186 = vst.msk [vmem:[#allocation2] sm:$0xff] %vm124, %v1181
  %1187 = vst.msk [vmem:[#allocation2 + $0x8] sm:$0xff] %vm124, %v1183
  // Predicated region
  $region30: #{decoder_forward.2} parent=0 // pred_check
    %p1188 = pneg %p26
  $region31: #{decoder_forward.2} parent=0 // pred_check_branch
    %1190 = sbr.rel (%p1188) target = $region33
  $region32: #{decoder_forward.2} parent=0 // pred_region
    %1191 = vst.msk [vmem:[%s7] sm:$0xff] %vm124, %v1181
    %1192 = vst.msk [vmem:[%s7 + $0x8] sm:$0xff] %vm124, %v1183
  $region33: #{decoder_forward.2} parent=0 // pred_fallthru
    _
  // Predicated region
  $region34: #{decoder_forward.2} parent=0 // pred_check
    _
  $region35: #{decoder_forward.2} parent=0 // pred_check_branch
    %1194 = sbr.rel (0) target = $region37
  $region36: #{decoder_forward.2} parent=0 // pred_region
    _
  $region37: #{decoder_forward.2} parent=0 // pred_fallthru
    _
  // Predicated region
  $region38: #{decoder_forward.2} parent=0 // pred_check
    _
  $region39: #{decoder_forward.2} parent=0 // pred_check_branch
    %1196 = sbr.rel (0) target = $region41
  $region40: #{decoder_forward.2} parent=0 // pred_region
    _
  $region41: #{decoder_forward.2} parent=0 // pred_fallthru
    _
  // Predicated region
  $region42: #{decoder_forward.2} parent=0 // pred_check
    _
  $region43: #{decoder_forward.2} parent=0 // pred_check_branch
    %1198 = sbr.rel (0) target = $region45
  $region44: #{decoder_forward.2} parent=0 // pred_region
    _
  $region45: #{decoder_forward.2} parent=0 // pred_fallthru
    _
  // Predicated region
  $region46: #{decoder_forward.2} parent=0 // pred_check
    _
  $region47: #{decoder_forward.2} parent=0 // pred_check_branch
    %1200 = sbr.rel (0) target = $region49
  $region48: #{decoder_forward.2} parent=0 // pred_region
    _
  $region49: #{decoder_forward.2} parent=0 // pred_fallthru
    _

</llo_original>
